<compile_context>
chip_gen: v5e
topology: v5e:2x2
jax: 0.10.0
libtpu: 0.0.40
codegen_flags: <defaults>
</compile_context>

<pallas_src>
import functools

import jax
import jax.numpy as jnp
from jax.experimental import pallas as pl
from jax.experimental.pallas import tpu as pltpu

LANE = 128                       # TPU lane width; Cout padded to a multiple.
_VMEM_LIMIT = 48 * 1024 * 1024   # explicit scoped-VMEM limit (fits v7x 64 MiB)


def _round_up(x, m):
    return (x + m - 1) // m * m


def _row_chunk(ho, wo):
    # Bound the per-chunk accumulator to ~1024 rows x 128 lanes of f32.
    return max(1, min(ho, 1024 // max(wo, 1)))


# ----------------------------------------------------------------------------
# Kernel 1: 4x4 / stride-2 / pad-1 conv (no bias), rewritten as a 2x2-tap
# stride-1 "valid" conv on the 2x2 space-to-depth of the zero-padded input.
# Patches are sliced out of the VMEM-resident input tap-by-tap (streamed
# im2col); accumulation in f32, MXU operands bf16.
# ----------------------------------------------------------------------------
def _conv4s2_kernel(x_ref, w_ref, o_ref, *, ho, wo, row_chunk):
    ck = x_ref.shape[-1]       # input channels per tap (= 4 * Cin)
    lane = o_ref.shape[-1]     # output-channel tile (128)

    for r0 in range(0, ho, row_chunk):          # static row-chunk loop
        rh = min(row_chunk, ho - r0)
        acc = jnp.zeros((rh * wo, lane), jnp.float32)
        for t in range(4):                      # static tap loop (unrolled)
            i, j = divmod(t, 2)
            a = x_ref[0, r0 + i:r0 + i + rh, j:j + wo, :].reshape(rh * wo, ck)
            acc = acc + jnp.dot(a.astype(jnp.bfloat16), w_ref[t],
                                preferred_element_type=jnp.float32)
        o_ref[0, r0:r0 + rh, :, :] = acc.reshape(rh, wo, lane).astype(o_ref.dtype)


def _conv1(x_s2d, w_taps, ho, wo):
    """x_s2d: (N, ho+1, wo+1, 4*Cin) f32, w_taps: (4, 4*Cin, Cpo) bf16."""
    n, hs, ws, ck = x_s2d.shape
    t, _, cpo = w_taps.shape
    kernel = functools.partial(_conv4s2_kernel, ho=ho, wo=wo,
                               row_chunk=_row_chunk(ho, wo))
    return pl.pallas_call(
        kernel,
        out_shape=jax.ShapeDtypeStruct((n, ho, wo, cpo), jnp.float32),
        grid=(n, cpo // LANE),
        in_specs=[
            pl.BlockSpec((1, hs, ws, ck), lambda b, co: (b, 0, 0, 0)),
            pl.BlockSpec((t, ck, LANE), lambda b, co: (0, 0, co)),
        ],
        out_specs=pl.BlockSpec((1, ho, wo, LANE), lambda b, co: (b, 0, 0, co)),
        compiler_params=pltpu.CompilerParams(
            dimension_semantics=("parallel", "parallel"),
            vmem_limit_bytes=_VMEM_LIMIT),
    )(x_s2d.astype(jnp.float32), w_taps)


# ----------------------------------------------------------------------------
# Kernel 2 (fused): 3x3 / stride-1 conv on a pre-padded input + bias +
# InstanceNorm2d (eps=1e-5, biased variance, no affine) + LeakyReLU(0.2).
# Pass 1 writes raw conv activations to the VMEM output block while
# accumulating per-channel sum / sum-of-squares; pass 2 normalizes + activates
# in VMEM, so the activation hits HBM exactly once.
# ----------------------------------------------------------------------------
def _conv3_in_lrelu_kernel(x_ref, w_ref, b_ref, o_ref, *, ho, wo, row_chunk,
                           inv_hw, eps, slope):
    ck = x_ref.shape[-1]
    lane = o_ref.shape[-1]

    s1 = jnp.zeros((1, lane), jnp.float32)
    s2 = jnp.zeros((1, lane), jnp.float32)

    # Pass 1: conv + bias, accumulate per-channel statistics.
    for r0 in range(0, ho, row_chunk):
        rh = min(row_chunk, ho - r0)
        acc = jnp.zeros((rh * wo, lane), jnp.float32)
        for t in range(9):
            i, j = divmod(t, 3)
            a = x_ref[0, r0 + i:r0 + i + rh, j:j + wo, :].reshape(rh * wo, ck)
            acc = acc + jnp.dot(a.astype(jnp.bfloat16), w_ref[t],
                                preferred_element_type=jnp.float32)
        acc = acc + b_ref[...]                                   # f32 bias
        s1 = s1 + jnp.sum(acc, axis=0, keepdims=True)
        s2 = s2 + jnp.sum(acc * acc, axis=0, keepdims=True)
        o_ref[0, r0:r0 + rh, :, :] = acc.reshape(rh, wo, lane)

    mean = s1 * inv_hw
    var = jnp.maximum(s2 * inv_hw - mean * mean, 0.0)
    scale = jax.lax.rsqrt(var + eps)                             # (1, lane)

    # Pass 2: normalize + LeakyReLU in place (VMEM only).
    for r0 in range(0, ho, row_chunk):
        rh = min(row_chunk, ho - r0)
        y = o_ref[0, r0:r0 + rh, :, :].reshape(rh * wo, lane)
        y = (y - mean) * scale
        y = jnp.where(y >= 0, y, slope * y)
        o_ref[0, r0:r0 + rh, :, :] = y.reshape(rh, wo, lane)


def _conv2_norm_act(y1_pad, w_taps, bias, ho, wo):
    """y1_pad: (N, ho+2, wo+2, Cpo) f32, w_taps: (9, Cpo, Cpo) bf16,
       bias: (Cpo,) f32.  Returns (N, ho, wo, Cpo) f32 (NHWC)."""
    n, hs, ws, ck = y1_pad.shape
    t, _, cpo = w_taps.shape
    kernel = functools.partial(_conv3_in_lrelu_kernel, ho=ho, wo=wo,
                               row_chunk=_row_chunk(ho, wo),
                               inv_hw=1.0 / float(ho * wo), eps=1e-5, slope=0.2)
    return pl.pallas_call(
        kernel,
        out_shape=jax.ShapeDtypeStruct((n, ho, wo, cpo), jnp.float32),
        grid=(n, cpo // LANE),
        in_specs=[
            pl.BlockSpec((1, hs, ws, ck), lambda b, co: (b, 0, 0, 0)),
            pl.BlockSpec((t, ck, LANE), lambda b, co: (0, 0, co)),
            pl.BlockSpec((1, LANE), lambda b, co: (0, co)),
        ],
        out_specs=pl.BlockSpec((1, ho, wo, LANE), lambda b, co: (b, 0, 0, co)),
        compiler_params=pltpu.CompilerParams(
            dimension_semantics=("parallel", "parallel"),
            vmem_limit_bytes=_VMEM_LIMIT),
    )(y1_pad.astype(jnp.float32), w_taps,
      bias.reshape(1, cpo).astype(jnp.float32))


# ----------------------------------------------------------------------------
# UNetDown forward (wrapper glue: padding / space-to-depth / weight permutes)
# ----------------------------------------------------------------------------
def unet_down_forward(x_nchw, w1, w2, b2):
    """x_nchw: (N, Cin, H, W) -> (N, Cout, H//2, W//2), matching PyTorch."""
    n, cin, h, w = x_nchw.shape
    cout = w1.shape[0]
    assert h % 2 == 0 and w % 2 == 0, "UNetDown expects even spatial dims"
    cpo = _round_up(cout, LANE)
    ho, wo = h // 2, w // 2

    x = jnp.transpose(x_nchw, (0, 2, 3, 1)).astype(jnp.float32)       # NHWC

    # ---- Conv2d(cin, cout, 4, stride=2, pad=1, bias=False) ----
    # Equivalent 2x2 stride-1 valid conv over the 2x2 space-to-depth of the
    # zero-padded input.
    xp = jnp.pad(x, ((0, 0), (1, 1), (1, 1), (0, 0)))                 # (n,h+2,w+2,cin)
    hs, ws = (h + 2) // 2, (w + 2) // 2                               # = ho+1, wo+1
    s2d = xp.reshape(n, hs, 2, ws, 2, cin)                            # (n,y,pi,x,pj,c)
    s2d = jnp.transpose(s2d, (0, 1, 3, 2, 4, 5)).reshape(n, hs, ws, 4 * cin)

    w1t = w1.reshape(cout, cin, 2, 2, 2, 2)                           # (co,c,i,pi,j,pj)
    w1t = jnp.transpose(w1t, (2, 4, 3, 5, 1, 0)).reshape(4, 4 * cin, cout)
    w1t = jnp.pad(w1t, ((0, 0), (0, 0), (0, cpo - cout))).astype(jnp.bfloat16)

    y1 = _conv1(s2d, w1t, ho, wo)                                     # (n,ho,wo,cpo)

    # ---- Conv2d(cout, cout, 3, stride=1, pad=1) + InstanceNorm + LeakyReLU ----
    y1p = jnp.pad(y1, ((0, 0), (1, 1), (1, 1), (0, 0)))
    w2t = jnp.transpose(w2, (2, 3, 1, 0)).reshape(9, cout, cout)      # (tap,cin,co)
    w2t = jnp.pad(w2t, ((0, 0), (0, cpo - cout), (0, cpo - cout))).astype(jnp.bfloat16)
    b2p = jnp.pad(b2.astype(jnp.float32), (0, cpo - cout))

    y = _conv2_norm_act(y1p, w2t, b2p, ho, wo)                        # (n,ho,wo,cpo)

    # TODO(synk): dropout path omitted — module default dropout=0.0 is a no-op.

    # Single NCHW transpose at the very end; drop the zero-padded channels.
    return jnp.transpose(y[..., :cout], (0, 3, 1, 2))


# ----------------------------------------------------------------------------
# Reference (plain XLA) for a sanity check at demo size
# ----------------------------------------------------------------------------
def _reference(x, w1, w2, b2):
    dn = ("NCHW", "OIHW", "NCHW")
    y1 = jax.lax.conv_general_dilated(x, w1, (2, 2), ((1, 1), (1, 1)),
                                      dimension_numbers=dn)
    y2 = jax.lax.conv_general_dilated(y1, w2, (1, 1), ((1, 1), (1, 1)),
                                      dimension_numbers=dn)
    y2 = y2 + b2[None, :, None, None]
    mean = jnp.mean(y2, axis=(2, 3), keepdims=True)
    var = jnp.mean((y2 - mean) ** 2, axis=(2, 3), keepdims=True)
    y = (y2 - mean) * jax.lax.rsqrt(var + 1e-5)
    return jnp.where(y >= 0, y, 0.2 * y)


# ----------------------------------------------------------------------------
# Demo
# ----------------------------------------------------------------------------
if __name__ == "__main__":
    key = jax.random.PRNGKey(0)
    k_x, k_w1, k_w2, k_b2 = jax.random.split(key, 4)

    N, Cin, Cout, H, W = 2, 4, 8, 16, 16

    x = jax.random.normal(k_x, (N, Cin, H, W), dtype=jnp.float32)
    w1 = 0.1 * jax.random.normal(k_w1, (Cout, Cin, 4, 4), dtype=jnp.float32)
    w2 = 0.1 * jax.random.normal(k_w2, (Cout, Cout, 3, 3), dtype=jnp.float32)
    b2 = 0.1 * jax.random.normal(k_b2, (Cout,), dtype=jnp.float32)

    out = jax.jit(unet_down_forward)(x, w1, w2, b2)
    out = jax.block_until_ready(out)

    assert out.shape == (N, Cout, H // 2, W // 2), out.shape
    assert bool(jnp.all(jnp.isfinite(out)))

    # Numerical sanity check (loose tolerance: bf16 MXU operands vs f32 ref).
    ref = _reference(x, w1, w2, b2)
    max_err = float(jnp.max(jnp.abs(out - ref)))
    assert max_err < 0.1, f"max abs err {max_err}"

    print("KERNEL_OK")
</pallas_src>

<mosaic_0001>
module attributes {stable_mosaic.version = 11 : i64} {
  func.func @_conv4s2_kernel(%arg0: i32, %arg1: i32, %arg2: memref<1x9x9x16xf32, #tpu.memory_space<vmem>>, %arg3: memref<4x16x128xbf16, #tpu.memory_space<vmem>>, %arg4: memref<1x8x8x128xf32, #tpu.memory_space<vmem>>) attributes {dimension_semantics = [#tpu.dimension_semantics<parallel>, #tpu.dimension_semantics<parallel>], iteration_bounds = array<i64: 2, 1>, scalar_prefetch = 0 : i64, scratch_operands = 0 : i64, tpu.core_type = #tpu.core_type<tc>, window_params = [{transform_indices = @transform_0, window_bounds = array<i64: 1, 9, 9, 16>}, {transform_indices = @transform_1, window_bounds = array<i64: 4, 16, 128>}, {transform_indices = @transform_2, window_bounds = array<i64: 1, 8, 8, 128>}]} {
    %cst = arith.constant 0.000000e+00 : f32
    %0 = vector.broadcast %cst : f32 to vector<64x128xf32>
    %c0 = arith.constant 0 : index
    %c0_0 = arith.constant 0 : index
    %c0_1 = arith.constant 0 : index
    %c0_2 = arith.constant 0 : index
    %1 = vector.load %arg2[%c0, %c0_0, %c0_1, %c0_2] : memref<1x9x9x16xf32, #tpu.memory_space<vmem>>, vector<1x8x8x16xf32>
    %2 = vector.shape_cast %1 : vector<1x8x8x16xf32> to vector<8x8x16xf32>
    %3 = vector.shape_cast %2 : vector<8x8x16xf32> to vector<64x16xf32>
    %4 = arith.truncf %3 : vector<64x16xf32> to vector<64x16xbf16>
    %c0_3 = arith.constant 0 : index
    %c0_4 = arith.constant 0 : index
    %c0_5 = arith.constant 0 : index
    %5 = vector.load %arg3[%c0_3, %c0_4, %c0_5] : memref<4x16x128xbf16, #tpu.memory_space<vmem>>, vector<1x16x128xbf16>
    %6 = vector.shape_cast %5 : vector<1x16x128xbf16> to vector<16x128xbf16>
    %cst_6 = arith.constant dense<0.000000e+00> : vector<64x128xf32>
    %7 = tpu.matmul %4, %6, %cst_6 {dimension_numbers = #tpu.dot_dimension_numbers<[1], [0], [0], [1], [0, 0, 1, 1], [], []>} : vector<64x16xbf16>, vector<16x128xbf16>, vector<64x128xf32> -> vector<64x128xf32>
    %8 = arith.addf %0, %7 : vector<64x128xf32>
    %c0_7 = arith.constant 0 : index
    %c0_8 = arith.constant 0 : index
    %c1 = arith.constant 1 : index
    %c0_9 = arith.constant 0 : index
    %9 = vector.load %arg2[%c0_7, %c0_8, %c1, %c0_9] : memref<1x9x9x16xf32, #tpu.memory_space<vmem>>, vector<1x8x8x16xf32>
    %10 = vector.shape_cast %9 : vector<1x8x8x16xf32> to vector<8x8x16xf32>
    %11 = vector.shape_cast %10 : vector<8x8x16xf32> to vector<64x16xf32>
    %12 = arith.truncf %11 : vector<64x16xf32> to vector<64x16xbf16>
    %c1_10 = arith.constant 1 : index
    %c0_11 = arith.constant 0 : index
    %c0_12 = arith.constant 0 : index
    %13 = vector.load %arg3[%c1_10, %c0_11, %c0_12] : memref<4x16x128xbf16, #tpu.memory_space<vmem>>, vector<1x16x128xbf16>
    %14 = vector.shape_cast %13 : vector<1x16x128xbf16> to vector<16x128xbf16>
    %cst_13 = arith.constant dense<0.000000e+00> : vector<64x128xf32>
    %15 = tpu.matmul %12, %14, %cst_13 {dimension_numbers = #tpu.dot_dimension_numbers<[1], [0], [0], [1], [0, 0, 1, 1], [], []>} : vector<64x16xbf16>, vector<16x128xbf16>, vector<64x128xf32> -> vector<64x128xf32>
    %16 = arith.addf %8, %15 : vector<64x128xf32>
    %c0_14 = arith.constant 0 : index
    %c1_15 = arith.constant 1 : index
    %c0_16 = arith.constant 0 : index
    %c0_17 = arith.constant 0 : index
    %17 = vector.load %arg2[%c0_14, %c1_15, %c0_16, %c0_17] : memref<1x9x9x16xf32, #tpu.memory_space<vmem>>, vector<1x8x8x16xf32>
    %18 = vector.shape_cast %17 : vector<1x8x8x16xf32> to vector<8x8x16xf32>
    %19 = vector.shape_cast %18 : vector<8x8x16xf32> to vector<64x16xf32>
    %20 = arith.truncf %19 : vector<64x16xf32> to vector<64x16xbf16>
    %c2 = arith.constant 2 : index
    %c0_18 = arith.constant 0 : index
    %c0_19 = arith.constant 0 : index
    %21 = vector.load %arg3[%c2, %c0_18, %c0_19] : memref<4x16x128xbf16, #tpu.memory_space<vmem>>, vector<1x16x128xbf16>
    %22 = vector.shape_cast %21 : vector<1x16x128xbf16> to vector<16x128xbf16>
    %cst_20 = arith.constant dense<0.000000e+00> : vector<64x128xf32>
    %23 = tpu.matmul %20, %22, %cst_20 {dimension_numbers = #tpu.dot_dimension_numbers<[1], [0], [0], [1], [0, 0, 1, 1], [], []>} : vector<64x16xbf16>, vector<16x128xbf16>, vector<64x128xf32> -> vector<64x128xf32>
    %24 = arith.addf %16, %23 : vector<64x128xf32>
    %c0_21 = arith.constant 0 : index
    %c1_22 = arith.constant 1 : index
    %c1_23 = arith.constant 1 : index
    %c0_24 = arith.constant 0 : index
    %25 = vector.load %arg2[%c0_21, %c1_22, %c1_23, %c0_24] : memref<1x9x9x16xf32, #tpu.memory_space<vmem>>, vector<1x8x8x16xf32>
    %26 = vector.shape_cast %25 : vector<1x8x8x16xf32> to vector<8x8x16xf32>
    %27 = vector.shape_cast %26 : vector<8x8x16xf32> to vector<64x16xf32>
    %28 = arith.truncf %27 : vector<64x16xf32> to vector<64x16xbf16>
    %c3 = arith.constant 3 : index
    %c0_25 = arith.constant 0 : index
    %c0_26 = arith.constant 0 : index
    %29 = vector.load %arg3[%c3, %c0_25, %c0_26] : memref<4x16x128xbf16, #tpu.memory_space<vmem>>, vector<1x16x128xbf16>
    %30 = vector.shape_cast %29 : vector<1x16x128xbf16> to vector<16x128xbf16>
    %cst_27 = arith.constant dense<0.000000e+00> : vector<64x128xf32>
    %31 = tpu.matmul %28, %30, %cst_27 {dimension_numbers = #tpu.dot_dimension_numbers<[1], [0], [0], [1], [0, 0, 1, 1], [], []>} : vector<64x16xbf16>, vector<16x128xbf16>, vector<64x128xf32> -> vector<64x128xf32>
    %32 = arith.addf %24, %31 : vector<64x128xf32>
    %33 = vector.shape_cast %32 : vector<64x128xf32> to vector<8x8x128xf32>
    %c0_28 = arith.constant 0 : index
    %c0_29 = arith.constant 0 : index
    %c0_30 = arith.constant 0 : index
    %c0_31 = arith.constant 0 : index
    %34 = vector.load %arg4[%c0_28, %c0_29, %c0_30, %c0_31] : memref<1x8x8x128xf32, #tpu.memory_space<vmem>>, vector<1x8x8x128xf32>
    %35 = vector.shape_cast %34 : vector<1x8x8x128xf32> to vector<8x8x128xf32>
    %36 = vector.shape_cast %33 : vector<8x8x128xf32> to vector<1x8x8x128xf32>
    tpu.vector_store %arg4[%c0_28, %c0_29, %c0_30, %c0_31], %36 {strides = array<i32>} : memref<1x8x8x128xf32, #tpu.memory_space<vmem>>, vector<1x8x8x128xf32>,
    return
  }
  func.func @transform_0(%arg0: i32, %arg1: i32) -> (i32, i32, i32, i32) {
    %c0_i32 = arith.constant 0 : i32
    %c0_i32_0 = arith.constant 0 : i32
    %c0_i32_1 = arith.constant 0 : i32
    %c0_i32_2 = arith.constant 0 : i32
    return %arg0, %c0_i32, %c0_i32_0, %c0_i32_1 : i32, i32, i32, i32
  }
  func.func @transform_1(%arg0: i32, %arg1: i32) -> (i32, i32, i32) {
    %c0_i32 = arith.constant 0 : i32
    %c0_i32_0 = arith.constant 0 : i32
    %c0_i32_1 = arith.constant 0 : i32
    return %c0_i32, %c0_i32_0, %arg1 : i32, i32, i32
  }
  func.func @transform_2(%arg0: i32, %arg1: i32) -> (i32, i32, i32, i32) {
    %c0_i32 = arith.constant 0 : i32
    %c0_i32_0 = arith.constant 0 : i32
    %c0_i32_1 = arith.constant 0 : i32
    return %arg0, %c0_i32, %c0_i32_0, %arg1 : i32, i32, i32, i32
  }
}

module attributes {stable_mosaic.version = 11 : i64} {
  func.func @_conv3_in_lrelu_kernel(%arg0: i32, %arg1: i32, %arg2: memref<1x10x10x128xf32, #tpu.memory_space<vmem>>, %arg3: memref<9x128x128xbf16, #tpu.memory_space<vmem>>, %arg4: memref<1x128xf32, #tpu.memory_space<vmem>>, %arg5: memref<1x8x8x128xf32, #tpu.memory_space<vmem>>) attributes {dimension_semantics = [#tpu.dimension_semantics<parallel>, #tpu.dimension_semantics<parallel>], iteration_bounds = array<i64: 2, 1>, scalar_prefetch = 0 : i64, scratch_operands = 0 : i64, tpu.core_type = #tpu.core_type<tc>, window_params = [{transform_indices = @transform_0, window_bounds = array<i64: 1, 10, 10, 128>}, {transform_indices = @transform_1, window_bounds = array<i64: 9, 128, 128>}, {transform_indices = @transform_2, window_bounds = array<i64: 1, 128>}, {transform_indices = @transform_3, window_bounds = array<i64: 1, 8, 8, 128>}]} {
    %cst = arith.constant 0.000000e+00 : f32
    %0 = vector.broadcast %cst : f32 to vector<1x128xf32>
    %cst_0 = arith.constant 0.000000e+00 : f32
    %1 = vector.broadcast %cst_0 : f32 to vector<1x128xf32>
    %cst_1 = arith.constant 0.000000e+00 : f32
    %2 = vector.broadcast %cst_1 : f32 to vector<64x128xf32>
    %c0 = arith.constant 0 : index
    %c0_2 = arith.constant 0 : index
    %c0_3 = arith.constant 0 : index
    %c0_4 = arith.constant 0 : index
    %3 = vector.load %arg2[%c0, %c0_2, %c0_3, %c0_4] : memref<1x10x10x128xf32, #tpu.memory_space<vmem>>, vector<1x8x8x128xf32>
    %4 = vector.shape_cast %3 : vector<1x8x8x128xf32> to vector<8x8x128xf32>
    %5 = vector.shape_cast %4 : vector<8x8x128xf32> to vector<64x128xf32>
    %6 = arith.truncf %5 : vector<64x128xf32> to vector<64x128xbf16>
    %c0_5 = arith.constant 0 : index
    %c0_6 = arith.constant 0 : index
    %c0_7 = arith.constant 0 : index
    %7 = vector.load %arg3[%c0_5, %c0_6, %c0_7] : memref<9x128x128xbf16, #tpu.memory_space<vmem>>, vector<1x128x128xbf16>
    %8 = vector.shape_cast %7 : vector<1x128x128xbf16> to vector<128x128xbf16>
    %cst_8 = arith.constant dense<0.000000e+00> : vector<64x128xf32>
    %9 = tpu.matmul %6, %8, %cst_8 {dimension_numbers = #tpu.dot_dimension_numbers<[1], [0], [0], [1], [0, 0, 1, 1], [], []>} : vector<64x128xbf16>, vector<128x128xbf16>, vector<64x128xf32> -> vector<64x128xf32>
    %10 = arith.addf %2, %9 : vector<64x128xf32>
    %c0_9 = arith.constant 0 : index
    %c0_10 = arith.constant 0 : index
    %c1 = arith.constant 1 : index
    %c0_11 = arith.constant 0 : index
    %11 = vector.load %arg2[%c0_9, %c0_10, %c1, %c0_11] : memref<1x10x10x128xf32, #tpu.memory_space<vmem>>, vector<1x8x8x128xf32>
    %12 = vector.shape_cast %11 : vector<1x8x8x128xf32> to vector<8x8x128xf32>
    %13 = vector.shape_cast %12 : vector<8x8x128xf32> to vector<64x128xf32>
    %14 = arith.truncf %13 : vector<64x128xf32> to vector<64x128xbf16>
    %c1_12 = arith.constant 1 : index
    %c0_13 = arith.constant 0 : index
    %c0_14 = arith.constant 0 : index
    %15 = vector.load %arg3[%c1_12, %c0_13, %c0_14] : memref<9x128x128xbf16, #tpu.memory_space<vmem>>, vector<1x128x128xbf16>
    %16 = vector.shape_cast %15 : vector<1x128x128xbf16> to vector<128x128xbf16>
    %cst_15 = arith.constant dense<0.000000e+00> : vector<64x128xf32>
    %17 = tpu.matmul %14, %16, %cst_15 {dimension_numbers = #tpu.dot_dimension_numbers<[1], [0], [0], [1], [0, 0, 1, 1], [], []>} : vector<64x128xbf16>, vector<128x128xbf16>, vector<64x128xf32> -> vector<64x128xf32>
    %18 = arith.addf %10, %17 : vector<64x128xf32>
    %c0_16 = arith.constant 0 : index
    %c0_17 = arith.constant 0 : index
    %c2 = arith.constant 2 : index
    %c0_18 = arith.constant 0 : index
    %19 = vector.load %arg2[%c0_16, %c0_17, %c2, %c0_18] : memref<1x10x10x128xf32, #tpu.memory_space<vmem>>, vector<1x8x8x128xf32>
    %20 = vector.shape_cast %19 : vector<1x8x8x128xf32> to vector<8x8x128xf32>
    %21 = vector.shape_cast %20 : vector<8x8x128xf32> to vector<64x128xf32>
    %22 = arith.truncf %21 : vector<64x128xf32> to vector<64x128xbf16>
    %c2_19 = arith.constant 2 : index
    %c0_20 = arith.constant 0 : index
    %c0_21 = arith.constant 0 : index
    %23 = vector.load %arg3[%c2_19, %c0_20, %c0_21] : memref<9x128x128xbf16, #tpu.memory_space<vmem>>, vector<1x128x128xbf16>
    %24 = vector.shape_cast %23 : vector<1x128x128xbf16> to vector<128x128xbf16>
    %cst_22 = arith.constant dense<0.000000e+00> : vector<64x128xf32>
    %25 = tpu.matmul %22, %24, %cst_22 {dimension_numbers = #tpu.dot_dimension_numbers<[1], [0], [0], [1], [0, 0, 1, 1], [], []>} : vector<64x128xbf16>, vector<128x128xbf16>, vector<64x128xf32> -> vector<64x128xf32>
    %26 = arith.addf %18, %25 : vector<64x128xf32>
    %c0_23 = arith.constant 0 : index
    %c1_24 = arith.constant 1 : index
    %c0_25 = arith.constant 0 : index
    %c0_26 = arith.constant 0 : index
    %27 = vector.load %arg2[%c0_23, %c1_24, %c0_25, %c0_26] : memref<1x10x10x128xf32, #tpu.memory_space<vmem>>, vector<1x8x8x128xf32>
    %28 = vector.shape_cast %27 : vector<1x8x8x128xf32> to vector<8x8x128xf32>
    %29 = vector.shape_cast %28 : vector<8x8x128xf32> to vector<64x128xf32>
    %30 = arith.truncf %29 : vector<64x128xf32> to vector<64x128xbf16>
    %c3 = arith.constant 3 : index
    %c0_27 = arith.constant 0 : index
    %c0_28 = arith.constant 0 : index
    %31 = vector.load %arg3[%c3, %c0_27, %c0_28] : memref<9x128x128xbf16, #tpu.memory_space<vmem>>, vector<1x128x128xbf16>
    %32 = vector.shape_cast %31 : vector<1x128x128xbf16> to vector<128x128xbf16>
    %cst_29 = arith.constant dense<0.000000e+00> : vector<64x128xf32>
    %33 = tpu.matmul %30, %32, %cst_29 {dimension_numbers = #tpu.dot_dimension_numbers<[1], [0], [0], [1], [0, 0, 1, 1], [], []>} : vector<64x128xbf16>, vector<128x128xbf16>, vector<64x128xf32> -> vector<64x128xf32>
    %34 = arith.addf %26, %33 : vector<64x128xf32>
    %c0_30 = arith.constant 0 : index
    %c1_31 = arith.constant 1 : index
    %c1_32 = arith.constant 1 : index
    %c0_33 = arith.constant 0 : index
    %35 = vector.load %arg2[%c0_30, %c1_31, %c1_32, %c0_33] : memref<1x10x10x128xf32, #tpu.memory_space<vmem>>, vector<1x8x8x128xf32>
    %36 = vector.shape_cast %35 : vector<1x8x8x128xf32> to vector<8x8x128xf32>
    %37 = vector.shape_cast %36 : vector<8x8x128xf32> to vector<64x128xf32>
    %38 = arith.truncf %37 : vector<64x128xf32> to vector<64x128xbf16>
    %c4 = arith.constant 4 : index
    %c0_34 = arith.constant 0 : index
    %c0_35 = arith.constant 0 : index
    %39 = vector.load %arg3[%c4, %c0_34, %c0_35] : memref<9x128x128xbf16, #tpu.memory_space<vmem>>, vector<1x128x128xbf16>
    %40 = vector.shape_cast %39 : vector<1x128x128xbf16> to vector<128x128xbf16>
    %cst_36 = arith.constant dense<0.000000e+00> : vector<64x128xf32>
    %41 = tpu.matmul %38, %40, %cst_36 {dimension_numbers = #tpu.dot_dimension_numbers<[1], [0], [0], [1], [0, 0, 1, 1], [], []>} : vector<64x128xbf16>, vector<128x128xbf16>, vector<64x128xf32> -> vector<64x128xf32>
    %42 = arith.addf %34, %41 : vector<64x128xf32>
    %c0_37 = arith.constant 0 : index
    %c1_38 = arith.constant 1 : index
    %c2_39 = arith.constant 2 : index
    %c0_40 = arith.constant 0 : index
    %43 = vector.load %arg2[%c0_37, %c1_38, %c2_39, %c0_40] : memref<1x10x10x128xf32, #tpu.memory_space<vmem>>, vector<1x8x8x128xf32>
    %44 = vector.shape_cast %43 : vector<1x8x8x128xf32> to vector<8x8x128xf32>
    %45 = vector.shape_cast %44 : vector<8x8x128xf32> to vector<64x128xf32>
    %46 = arith.truncf %45 : vector<64x128xf32> to vector<64x128xbf16>
    %c5 = arith.constant 5 : index
    %c0_41 = arith.constant 0 : index
    %c0_42 = arith.constant 0 : index
    %47 = vector.load %arg3[%c5, %c0_41, %c0_42] : memref<9x128x128xbf16, #tpu.memory_space<vmem>>, vector<1x128x128xbf16>
    %48 = vector.shape_cast %47 : vector<1x128x128xbf16> to vector<128x128xbf16>
    %cst_43 = arith.constant dense<0.000000e+00> : vector<64x128xf32>
    %49 = tpu.matmul %46, %48, %cst_43 {dimension_numbers = #tpu.dot_dimension_numbers<[1], [0], [0], [1], [0, 0, 1, 1], [], []>} : vector<64x128xbf16>, vector<128x128xbf16>, vector<64x128xf32> -> vector<64x128xf32>
    %50 = arith.addf %42, %49 : vector<64x128xf32>
    %c0_44 = arith.constant 0 : index
    %c2_45 = arith.constant 2 : index
    %c0_46 = arith.constant 0 : index
    %c0_47 = arith.constant 0 : index
    %51 = vector.load %arg2[%c0_44, %c2_45, %c0_46, %c0_47] : memref<1x10x10x128xf32, #tpu.memory_space<vmem>>, vector<1x8x8x128xf32>
    %52 = vector.shape_cast %51 : vector<1x8x8x128xf32> to vector<8x8x128xf32>
    %53 = vector.shape_cast %52 : vector<8x8x128xf32> to vector<64x128xf32>
    %54 = arith.truncf %53 : vector<64x128xf32> to vector<64x128xbf16>
    %c6 = arith.constant 6 : index
    %c0_48 = arith.constant 0 : index
    %c0_49 = arith.constant 0 : index
    %55 = vector.load %arg3[%c6, %c0_48, %c0_49] : memref<9x128x128xbf16, #tpu.memory_space<vmem>>, vector<1x128x128xbf16>
    %56 = vector.shape_cast %55 : vector<1x128x128xbf16> to vector<128x128xbf16>
    %cst_50 = arith.constant dense<0.000000e+00> : vector<64x128xf32>
    %57 = tpu.matmul %54, %56, %cst_50 {dimension_numbers = #tpu.dot_dimension_numbers<[1], [0], [0], [1], [0, 0, 1, 1], [], []>} : vector<64x128xbf16>, vector<128x128xbf16>, vector<64x128xf32> -> vector<64x128xf32>
    %58 = arith.addf %50, %57 : vector<64x128xf32>
    %c0_51 = arith.constant 0 : index
    %c2_52 = arith.constant 2 : index
    %c1_53 = arith.constant 1 : index
    %c0_54 = arith.constant 0 : index
    %59 = vector.load %arg2[%c0_51, %c2_52, %c1_53, %c0_54] : memref<1x10x10x128xf32, #tpu.memory_space<vmem>>, vector<1x8x8x128xf32>
    %60 = vector.shape_cast %59 : vector<1x8x8x128xf32> to vector<8x8x128xf32>
    %61 = vector.shape_cast %60 : vector<8x8x128xf32> to vector<64x128xf32>
    %62 = arith.truncf %61 : vector<64x128xf32> to vector<64x128xbf16>
    %c7 = arith.constant 7 : index
    %c0_55 = arith.constant 0 : index
    %c0_56 = arith.constant 0 : index
    %63 = vector.load %arg3[%c7, %c0_55, %c0_56] : memref<9x128x128xbf16, #tpu.memory_space<vmem>>, vector<1x128x128xbf16>
    %64 = vector.shape_cast %63 : vector<1x128x128xbf16> to vector<128x128xbf16>
    %cst_57 = arith.constant dense<0.000000e+00> : vector<64x128xf32>
    %65 = tpu.matmul %62, %64, %cst_57 {dimension_numbers = #tpu.dot_dimension_numbers<[1], [0], [0], [1], [0, 0, 1, 1], [], []>} : vector<64x128xbf16>, vector<128x128xbf16>, vector<64x128xf32> -> vector<64x128xf32>
    %66 = arith.addf %58, %65 : vector<64x128xf32>
    %c0_58 = arith.constant 0 : index
    %c2_59 = arith.constant 2 : index
    %c2_60 = arith.constant 2 : index
    %c0_61 = arith.constant 0 : index
    %67 = vector.load %arg2[%c0_58, %c2_59, %c2_60, %c0_61] : memref<1x10x10x128xf32, #tpu.memory_space<vmem>>, vector<1x8x8x128xf32>
    %68 = vector.shape_cast %67 : vector<1x8x8x128xf32> to vector<8x8x128xf32>
    %69 = vector.shape_cast %68 : vector<8x8x128xf32> to vector<64x128xf32>
    %70 = arith.truncf %69 : vector<64x128xf32> to vector<64x128xbf16>
    %c8 = arith.constant 8 : index
    %c0_62 = arith.constant 0 : index
    %c0_63 = arith.constant 0 : index
    %71 = vector.load %arg3[%c8, %c0_62, %c0_63] : memref<9x128x128xbf16, #tpu.memory_space<vmem>>, vector<1x128x128xbf16>
    %72 = vector.shape_cast %71 : vector<1x128x128xbf16> to vector<128x128xbf16>
    %cst_64 = arith.constant dense<0.000000e+00> : vector<64x128xf32>
    %73 = tpu.matmul %70, %72, %cst_64 {dimension_numbers = #tpu.dot_dimension_numbers<[1], [0], [0], [1], [0, 0, 1, 1], [], []>} : vector<64x128xbf16>, vector<128x128xbf16>, vector<64x128xf32> -> vector<64x128xf32>
    %74 = arith.addf %66, %73 : vector<64x128xf32>
    %c0_65 = arith.constant 0 : index
    %c0_66 = arith.constant 0 : index
    %75 = vector.load %arg4[%c0_65, %c0_66] : memref<1x128xf32, #tpu.memory_space<vmem>>, vector<1x128xf32>
    %76 = vector.broadcast %75 : vector<1x128xf32> to vector<64x128xf32>
    %77 = arith.addf %74, %76 : vector<64x128xf32>
    %cst_67 = arith.constant dense<0.000000e+00> : vector<128xf32>
    %78 = vector.multi_reduction <add>, %77, %cst_67 [0] : vector<64x128xf32> to vector<128xf32>
    %79 = vector.shape_cast %78 : vector<128xf32> to vector<1x128xf32>
    %80 = arith.addf %0, %79 : vector<1x128xf32>
    %81 = arith.mulf %77, %77 : vector<64x128xf32>
    %cst_68 = arith.constant dense<0.000000e+00> : vector<128xf32>
    %82 = vector.multi_reduction <add>, %81, %cst_68 [0] : vector<64x128xf32> to vector<128xf32>
    %83 = vector.shape_cast %82 : vector<128xf32> to vector<1x128xf32>
    %84 = arith.addf %1, %83 : vector<1x128xf32>
    %85 = vector.shape_cast %77 : vector<64x128xf32> to vector<8x8x128xf32>
    %c0_69 = arith.constant 0 : index
    %c0_70 = arith.constant 0 : index
    %c0_71 = arith.constant 0 : index
    %c0_72 = arith.constant 0 : index
    %86 = vector.load %arg5[%c0_69, %c0_70, %c0_71, %c0_72] : memref<1x8x8x128xf32, #tpu.memory_space<vmem>>, vector<1x8x8x128xf32>
    %87 = vector.shape_cast %86 : vector<1x8x8x128xf32> to vector<8x8x128xf32>
    %88 = vector.shape_cast %85 : vector<8x8x128xf32> to vector<1x8x8x128xf32>
    tpu.vector_store %arg5[%c0_69, %c0_70, %c0_71, %c0_72], %88 {strides = array<i32>} : memref<1x8x8x128xf32, #tpu.memory_space<vmem>>, vector<1x8x8x128xf32>,
    %cst_73 = arith.constant 1.562500e-02 : f32
    %89 = vector.broadcast %cst_73 : f32 to vector<1x128xf32>
    %90 = arith.mulf %80, %89 : vector<1x128xf32>
    %cst_74 = arith.constant 1.562500e-02 : f32
    %91 = vector.broadcast %cst_74 : f32 to vector<1x128xf32>
    %92 = arith.mulf %84, %91 : vector<1x128xf32>
    %93 = arith.mulf %90, %90 : vector<1x128xf32>
    %94 = arith.subf %92, %93 : vector<1x128xf32>
    %cst_75 = arith.constant 0.000000e+00 : f32
    %95 = vector.broadcast %cst_75 : f32 to vector<1x128xf32>
    %96 = arith.maximumf %94, %95 : vector<1x128xf32>
    %cst_76 = arith.constant 9.99999974E-6 : f32
    %97 = vector.broadcast %cst_76 : f32 to vector<1x128xf32>
    %98 = arith.addf %96, %97 : vector<1x128xf32>
    %99 = math.rsqrt %98 : vector<1x128xf32>
    %c0_77 = arith.constant 0 : index
    %c0_78 = arith.constant 0 : index
    %c0_79 = arith.constant 0 : index
    %c0_80 = arith.constant 0 : index
    %100 = vector.load %arg5[%c0_77, %c0_78, %c0_79, %c0_80] : memref<1x8x8x128xf32, #tpu.memory_space<vmem>>, vector<1x8x8x128xf32>
    %101 = vector.shape_cast %100 : vector<1x8x8x128xf32> to vector<8x8x128xf32>
    %102 = vector.shape_cast %101 : vector<8x8x128xf32> to vector<64x128xf32>
    %103 = vector.broadcast %90 : vector<1x128xf32> to vector<64x128xf32>
    %104 = arith.subf %102, %103 : vector<64x128xf32>
    %105 = vector.broadcast %99 : vector<1x128xf32> to vector<64x128xf32>
    %106 = arith.mulf %104, %105 : vector<64x128xf32>
    %cst_81 = arith.constant 0.000000e+00 : f32
    %107 = vector.broadcast %cst_81 : f32 to vector<64x128xf32>
    %108 = arith.cmpf oge, %106, %107 : vector<64x128xf32>
    %cst_82 = arith.constant 2.000000e-01 : f32
    %109 = vector.broadcast %cst_82 : f32 to vector<64x128xf32>
    %110 = arith.mulf %109, %106 : vector<64x128xf32>
    %111 = arith.select %108, %106, %110 : vector<64x128xi1>, vector<64x128xf32>
    %112 = vector.shape_cast %111 : vector<64x128xf32> to vector<8x8x128xf32>
    %c0_83 = arith.constant 0 : index
    %c0_84 = arith.constant 0 : index
    %c0_85 = arith.constant 0 : index
    %c0_86 = arith.constant 0 : index
    %113 = vector.load %arg5[%c0_83, %c0_84, %c0_85, %c0_86] : memref<1x8x8x128xf32, #tpu.memory_space<vmem>>, vector<1x8x8x128xf32>
    %114 = vector.shape_cast %113 : vector<1x8x8x128xf32> to vector<8x8x128xf32>
    %115 = vector.shape_cast %112 : vector<8x8x128xf32> to vector<1x8x8x128xf32>
    tpu.vector_store %arg5[%c0_83, %c0_84, %c0_85, %c0_86], %115 {strides = array<i32>} : memref<1x8x8x128xf32, #tpu.memory_space<vmem>>, vector<1x8x8x128xf32>,
    return
  }
  func.func @transform_0(%arg0: i32, %arg1: i32) -> (i32, i32, i32, i32) {
    %c0_i32 = arith.constant 0 : i32
    %c0_i32_0 = arith.constant 0 : i32
    %c0_i32_1 = arith.constant 0 : i32
    %c0_i32_2 = arith.constant 0 : i32
    return %arg0, %c0_i32, %c0_i32_0, %c0_i32_1 : i32, i32, i32, i32
  }
  func.func @transform_1(%arg0: i32, %arg1: i32) -> (i32, i32, i32) {
    %c0_i32 = arith.constant 0 : i32
    %c0_i32_0 = arith.constant 0 : i32
    %c0_i32_1 = arith.constant 0 : i32
    return %c0_i32, %c0_i32_0, %arg1 : i32, i32, i32
  }
  func.func @transform_2(%arg0: i32, %arg1: i32) -> (i32, i32) {
    %c0_i32 = arith.constant 0 : i32
    %c0_i32_0 = arith.constant 0 : i32
    return %c0_i32, %arg1 : i32, i32
  }
  func.func @transform_3(%arg0: i32, %arg1: i32) -> (i32, i32, i32, i32) {
    %c0_i32 = arith.constant 0 : i32
    %c0_i32_0 = arith.constant 0 : i32
    %c0_i32_1 = arith.constant 0 : i32
    return %arg0, %c0_i32, %c0_i32_0, %arg1 : i32, i32, i32, i32
  }
}

</mosaic_0001>

<llo_original>
// kernel: unet_down_forward.2
$region0: #{unet_down_forward.2}
  #allocation0 [shape = 'u32[]', space=smem, size = 0x4, offset = 0x4, fixed_abs, tag = 'smem constant byte address 0x4 - core index']
  #allocation1 [shape = 'u32[72,128]{1,0:T(1,128)}', space=vmem, size = 0x9000, scoped, tag = 'internal scratch']
  %s0 = inlined_call_operand.vmem [shape: f32[2,9,9,16], index: 0, kind: input, shape index: {}]
  %s1 = inlined_call_operand.vmem [shape: bf16[4,16,128], index: 1, kind: input, shape index: {}]
  %s2 = inlined_call_operand.vmem [shape: f32[2,8,8,128], index: 2, kind: output, shape index: {}]
  %s3 = sld [smem:[#allocation0]]
  $region41: #{unet_down_forward.2} parent=0
    _
  %s5 = ssub.s32 1, %s3
  %s6 = scalar_select 0, %s5, %s3
  loop: start=0, step=1, limit=4
  $region2: #{unet_down_forward.2} parent=0 // loop_pre_header
    _
  $region3: #{unet_down_forward.2} parent=0 // loop_header
    %s8 = sphi 0, %s12
    %p9 = scmp.ge.s32.totalorder %s8, 4
    %s15 = sphi 0, %s27
    %s16 = sphi 0, %s23
    %s17 = sphi 0, %s15
    %s18 = sphi 0, %s16
    %s19 = sphi 0, %s17
    %s20 = sphi 0, %s18
    %s30 = sphi 0, %s32
    %s33 = sphi 0, %s30
    %s34 = sphi 0, %s33
    %s50 = sphi 0, %s34
    %s56 = sphi 0, %s58
    %s59 = sphi 0, %s56
    %s60 = sphi 0, %s59
    %s76 = sphi 0, %s60
    %s84 = sphi 0, %s86
    %s87 = sphi 0, %s84
    %s88 = sphi 0, %s87
    %s104 = sphi 0, %s88
  $region4: #{unet_down_forward.2} parent=0 // loop_header_branch
    %11 = sbr.rel (%p9) target = $region8
  $region5: #{unet_down_forward.2} parent=0 // loop_body
    %s13 = ssub.s32 %s8, 1
    %s14 = ssub.s32 %s8, 2
    %s21 = sadd.s32 1, %s16
    %p22 = scmp.ge.s32.totalorder %s21, 1
    %s23 = scalar_select %p22, 0, %s21
    %s24 = sadd.s32 1, %s15
    %s25 = scalar_select %p22, %s24, %s15
    %p26 = scmp.ge.s32.totalorder %s25, 2
    %s27 = scalar_select %p26, 0, %s25
    %s28 = ssub.s32 %s15, %s27
    %p29 = scmp.eq.s32.totalorder %s28, 0
    %s31 = sadd.s32 %s30, 1
    %s32 = scalar_select %p29, %s30, %s31
    %p35 = pneg %p29
    %p36 = scmp.eq.s32.totalorder %s8, 1
    %p37 = por %p35, %p36
    %p38 = scmp.ne.s32.totalorder %s30, %s33
    %p39 = scmp.eq.s32.totalorder %s8, 0
    %p40 = por %p38, %p39
    %p41 = scmp.ne.s32.totalorder %s30, %s33
    %p42 = scmp.eq.s32.totalorder %s13, 1
    %p43 = por %p41, %p42
    %p44 = scmp.ne.s32.totalorder %s33, %s34
    %p45 = scmp.eq.s32.totalorder %s13, 0
    %p46 = por %p44, %p45
    %p47 = scmp.ne.s32.totalorder %s33, %s34
    %p48 = scmp.eq.s32.totalorder %s14, 1
    %p49 = por %p47, %p48
    %p51 = scmp.ne.s32.totalorder %s34, %s50
    %p52 = scmp.eq.s32.totalorder %s14, 0
    %p53 = por %p51, %p52
    %s54 = ssub.s32 %s16, %s23
    %p55 = scmp.eq.s32.totalorder %s54, 0
    %s57 = sadd.s32 %s56, 1
    %s58 = scalar_select %p55, %s56, %s57
    %p61 = pneg %p55
    %p62 = scmp.eq.s32.totalorder %s8, 1
    %p63 = por %p61, %p62
    %p64 = scmp.ne.s32.totalorder %s56, %s59
    %p65 = scmp.eq.s32.totalorder %s8, 0
    %p66 = por %p64, %p65
    %p67 = scmp.ne.s32.totalorder %s56, %s59
    %p68 = scmp.eq.s32.totalorder %s13, 1
    %p69 = por %p67, %p68
    %p70 = scmp.ne.s32.totalorder %s59, %s60
    %p71 = scmp.eq.s32.totalorder %s13, 0
    %p72 = por %p70, %p71
    %p73 = scmp.ne.s32.totalorder %s59, %s60
    %p74 = scmp.eq.s32.totalorder %s14, 1
    %p75 = por %p73, %p74
    %p77 = scmp.ne.s32.totalorder %s60, %s76
    %p78 = scmp.eq.s32.totalorder %s14, 0
    %p79 = por %p77, %p78
    %s80 = ssub.s32 %s15, %s27
    %s81 = ssub.s32 %s16, %s23
    %s82 = sor.u32 %s80, %s81
    %p83 = scmp.eq.s32.totalorder %s82, 0
    %s85 = sadd.s32 %s84, 1
    %s86 = scalar_select %p83, %s84, %s85
    %p89 = pneg %p83
    %p90 = scmp.eq.s32.totalorder %s8, 1
    %p91 = por %p89, %p90
    %p92 = scmp.ne.s32.totalorder %s84, %s87
    %p93 = scmp.eq.s32.totalorder %s8, 0
    %p94 = por %p92, %p93
    %p95 = scmp.ne.s32.totalorder %s84, %s87
    %p96 = scmp.eq.s32.totalorder %s13, 1
    %p97 = por %p95, %p96
    %p98 = scmp.ne.s32.totalorder %s87, %s88
    %p99 = scmp.eq.s32.totalorder %s13, 0
    %p100 = por %p98, %p99
    %p101 = scmp.ne.s32.totalorder %s87, %s88
    %p102 = scmp.eq.s32.totalorder %s14, 1
    %p103 = por %p101, %p102
    %p105 = scmp.ne.s32.totalorder %s88, %s104
    %p106 = scmp.eq.s32.totalorder %s14, 0
    %p107 = por %p105, %p106
    %p108 = scmp.le.s32.totalorder 1, %s8
    %p109 = scmp.lt.s32.totalorder %s8, 3
    %p110 = pnand %p108, %p109
    %p111 = pneg %p110
    // Predicated region
    $region9: #{unet_down_forward.2} parent=5 // pred_check
      _
    $region10: #{unet_down_forward.2} parent=5 // pred_check_branch
      %113 = sbr.rel (%p110) target = $region12
    $region11: #{unet_down_forward.2} parent=5 // pred_region
      %s114 = ssub.s32 %s8, 1
      // Predicated region
      $region13: #{unet_down_forward.2} parent=11 // pred_check
        %p115 = pneg %p72
      $region14: #{unet_down_forward.2} parent=11 // pred_check_branch
        %117 = sbr.rel (%p115) target = $region16
      $region15: #{unet_down_forward.2} parent=11 // pred_region
        %p118 = scmp.lt.s32.totalorder %s18, 0
        %s119 = scalar_select %p118, %s18, 0
        %s120 = smul.addr %s119, 4
        %s121 = scalar_lea.vmem %s1, %s120
      $region16: #{unet_down_forward.2} parent=11 // pred_fallthru
        _
    $region12: #{unet_down_forward.2} parent=5 // pred_fallthru
      _
    %p122 = scmp.lt.s32.totalorder %s8, 2
    // Predicated region
    $region17: #{unet_down_forward.2} parent=5 // pred_check
      %p123 = pneg %p122
    $region18: #{unet_down_forward.2} parent=5 // pred_check_branch
      %125 = sbr.rel (%p123) target = $region20
    $region19: #{unet_down_forward.2} parent=5 // pred_region
      // Predicated region
      $region21: #{unet_down_forward.2} parent=19 // pred_check
        %p126 = pneg %p40
      $region22: #{unet_down_forward.2} parent=19 // pred_check_branch
        %128 = sbr.rel (%p126) target = $region24
      $region23: #{unet_down_forward.2} parent=19 // pred_region
        %p129 = scmp.lt.s32.totalorder %s15, 1
        %s130 = scalar_select %p129, %s15, 1
        %s131 = smul.addr %s130, 18
        %s132 = smul.addr %s131, 8
        %s133 = scalar_lea.vmem %s0, %s132
      $region24: #{unet_down_forward.2} parent=19 // pred_fallthru
        _
    $region20: #{unet_down_forward.2} parent=5 // pred_fallthru
      _
    %p134 = scmp.le.s32.totalorder 1, %s8
    %p135 = scmp.lt.s32.totalorder %s8, 3
    %p136 = pnand %p134, %p135
    %p137 = pneg %p136
    // Predicated region
    $region25: #{unet_down_forward.2} parent=5 // pred_check
      _
    $region26: #{unet_down_forward.2} parent=5 // pred_check_branch
      %139 = sbr.rel (%p136) target = $region28
    $region27: #{unet_down_forward.2} parent=5 // pred_region
      %s140 = ssub.s32 %s8, 1
      %p141 = scmp.lt.s32.totalorder %s17, 1
      %s142 = scalar_select %p141, %s17, 1
      %s143 = smul.addr %s142, 18
      %s144 = smul.addr %s143, 8
      %s145 = scalar_lea.vmem %s0, %s144
      %p146 = pneg %p46
      %p147 = pneg %p43
      %p148 = scmp.lt.s32.totalorder %s18, 0
      %s149 = scalar_select %p148, %s18, 0
      %s150 = smul.addr %s149, 4
      %s151 = scalar_lea.vmem %s1, %s150
      %p152 = pneg %p72
      %p153 = pneg %p69
      %p154 = pneg %p100
      %p155 = pneg %p97
      %p156 = scmp.lt.s32.totalorder %s17, 1
      %s157 = scalar_select %p156, %s17, 1
      %p158 = scmp.lt.s32.totalorder %s18, 0
      %s159 = scalar_select %p158, %s18, 0
      %s160 = smul.addr %s157, 8
      %s161 = sadd.s32 %s159, %s160
      %s162 = smul.addr %s161, 8
      %s163 = scalar_lea.vmem %s2, %s162
      %p164 = scmp.lt.s32.totalorder %s17, 1
      %s165 = scalar_select %p164, %s17, 1
      %s166 = smul.addr %s165, 18
      %s167 = smul.addr %s166, 8
      %s168 = scalar_lea.vmem %s0, %s167
      %p169 = scmp.lt.s32.totalorder %s18, 0
      %s170 = scalar_select %p169, %s18, 0
      %s171 = smul.addr %s170, 4
      %s172 = scalar_lea.vmem %s1, %s171
      %p173 = scmp.lt.s32.totalorder %s17, 1
      %s174 = scalar_select %p173, %s17, 1
      %p175 = scmp.lt.s32.totalorder %s18, 0
      %s176 = scalar_select %p175, %s18, 0
      %s177 = smul.addr %s174, 8
      %s178 = sadd.s32 %s176, %s177
      %s179 = smul.addr %s178, 8
      %s180 = scalar_lea.vmem %s2, %s179
      %v182 = vld [vmem:[%s168] sm:$0xff]
      %v183 = vld [vmem:[%s168 + $0x10] sm:$0xff]
      %v184 = vld [vmem:[%s168 + $0x20] sm:$0xff]
      %v185 = vld [vmem:[%s168 + $0x30] sm:$0xff]
      %v186 = vld [vmem:[%s168 + $0x40] sm:$0xff]
      %v187 = vld [vmem:[%s168 + $0x50] sm:$0xff]
      %v188 = vld [vmem:[%s168 + $0x60] sm:$0xff]
      %v189 = vld [vmem:[%s168 + $0x70] sm:$0xff]
      %v190 = vpack.c.bf16 %v183, %v182
      %v191 = vpack.c.bf16 %v185, %v184
      %v192 = vpack.c.bf16 %v187, %v186
      %v193 = vpack.c.bf16 %v189, %v188
      %v194 = vld [vmem:[%s172] sm:$0xf]
      %v195 = vld [vmem:[%s172 + $0x4] sm:$0xf]
      %v196 = vld [vmem:[%s168 + $0x1] sm:$0xff]
      %v197 = vld [vmem:[%s168 + $0x11] sm:$0xff]
      %v198 = vld [vmem:[%s168 + $0x21] sm:$0xff]
      %v199 = vld [vmem:[%s168 + $0x31] sm:$0xff]
      %v200 = vld [vmem:[%s168 + $0x41] sm:$0xff]
      %v201 = vld [vmem:[%s168 + $0x51] sm:$0xff]
      %v202 = vld [vmem:[%s168 + $0x61] sm:$0xff]
      %v203 = vld [vmem:[%s168 + $0x71] sm:$0xff]
      %v204 = vpack.c.bf16 %v197, %v196
      %v205 = vpack.c.bf16 %v199, %v198
      %v206 = vpack.c.bf16 %v201, %v200
      %v207 = vpack.c.bf16 %v203, %v202
      %s208 = scalar_lea.vmem %s172, 8
      %v209 = vld [vmem:[%s208] sm:$0xf]
      %v210 = vld [vmem:[%s208 + $0x4] sm:$0xf]
      %v213 = vunpack.c.l.b16 %v209
      %v214 = vunpack.c.l.b16 %v210
      %v215 = vpack.c.b16 %v214, %v213
      %vm217 = vcmask 130048
      %v219 = vsel %vm217, %v204, 0
      %v222 = vsel %vm217, %v205, 0
      %v225 = vsel %vm217, %v206, 0
      %v228 = vsel %vm217, %v207, 0
      %230 = vmatpush.bf16.msra.mxu0 0
      %231 = vmatpush.bf16.msra.mxu0 0
      %232 = vmatpush.bf16.msra.mxu0 0
      %233 = vmatpush.bf16.msra.mxu0 0
      %234 = vmatpush.bf16.msra.mxu0 0
      %235 = vmatpush.bf16.msra.mxu0 0
      %236 = vmatpush.bf16.msra.mxu0 0
      %237 = vmatpush.bf16.msra.mxu0 %v215
      %238 = vmatmul.bf16.gmra.mxu0 %v219
      %v239 = vpop.f32.mrf.mxu0
      %v240 = vadd.f32 0.0, %v239
      %v241 = vpop.f32.mrf.mxu0
      %v242 = vadd.f32 0.0, %v241
      %243 = vmatmul.bf16.gmra.mxu0 %v222
      %v244 = vpop.f32.mrf.mxu0
      %v245 = vadd.f32 0.0, %v244
      %v246 = vpop.f32.mrf.mxu0
      %v247 = vadd.f32 0.0, %v246
      %248 = vmatmul.bf16.gmra.mxu0 %v225
      %v249 = vpop.f32.mrf.mxu0
      %v250 = vadd.f32 0.0, %v249
      %v251 = vpop.f32.mrf.mxu0
      %v252 = vadd.f32 0.0, %v251
      %253 = vmatmul.bf16.gmra.mxu0 %v228
      %v254 = vpop.f32.mrf.mxu0
      %v255 = vadd.f32 0.0, %v254
      %v256 = vpop.f32.mrf.mxu0
      %v257 = vadd.f32 0.0, %v256
      %258 = vdwg.mxu0
      %v261 = vunpack.c.l.b16 %v194
      %v262 = vunpack.c.l.b16 %v195
      %v263 = vpack.c.b16 %v262, %v261
      %v266 = vsel %vm217, %v190, 0
      %v269 = vsel %vm217, %v191, 0
      %v272 = vsel %vm217, %v192, 0
      %v275 = vsel %vm217, %v193, 0
      %277 = vmatpush.bf16.msra.mxu0 0
      %278 = vmatpush.bf16.msra.mxu0 0
      %279 = vmatpush.bf16.msra.mxu0 0
      %280 = vmatpush.bf16.msra.mxu0 0
      %281 = vmatpush.bf16.msra.mxu0 0
      %282 = vmatpush.bf16.msra.mxu0 0
      %283 = vmatpush.bf16.msra.mxu0 0
      %284 = vmatpush.bf16.msra.mxu0 %v263
      %285 = vmatmul.bf16.gmra.mxu0 %v266
      %v286 = vpop.f32.mrf.mxu0
      %v287 = vadd.f32 %v240, %v286
      %v288 = vpop.f32.mrf.mxu0
      %v289 = vadd.f32 %v242, %v288
      %290 = vmatmul.bf16.gmra.mxu0 %v269
      %v291 = vpop.f32.mrf.mxu0
      %v292 = vadd.f32 %v245, %v291
      %v293 = vpop.f32.mrf.mxu0
      %v294 = vadd.f32 %v247, %v293
      %295 = vmatmul.bf16.gmra.mxu0 %v272
      %v296 = vpop.f32.mrf.mxu0
      %v297 = vadd.f32 %v250, %v296
      %v298 = vpop.f32.mrf.mxu0
      %v299 = vadd.f32 %v252, %v298
      %300 = vmatmul.bf16.gmra.mxu0 %v275
      %v301 = vpop.f32.mrf.mxu0
      %v302 = vadd.f32 %v255, %v301
      %v303 = vpop.f32.mrf.mxu0
      %v304 = vadd.f32 %v257, %v303
      %305 = vdwg.mxu0
      %s306 = scalar_lea.vmem %s168, 16
      %v307 = vld [vmem:[%s306] sm:$0xff]
      %v308 = vld [vmem:[%s306 + $0x10] sm:$0xff]
      %v309 = vld [vmem:[%s306 + $0x20] sm:$0xff]
      %v310 = vld [vmem:[%s306 + $0x30] sm:$0xff]
      %v311 = vld [vmem:[%s306 + $0x40] sm:$0xff]
      %v312 = vld [vmem:[%s306 + $0x50] sm:$0xff]
      %v313 = vld [vmem:[%s306 + $0x60] sm:$0xff]
      %v314 = vld [vmem:[%s306 + $0x70] sm:$0xff]
      %v315 = vpack.c.bf16 %v308, %v307
      %v316 = vpack.c.bf16 %v310, %v309
      %v317 = vpack.c.bf16 %v312, %v311
      %v318 = vpack.c.bf16 %v314, %v313
      %s319 = scalar_lea.vmem %s172, 16
      %v320 = vld [vmem:[%s319] sm:$0xf]
      %v321 = vld [vmem:[%s319 + $0x4] sm:$0xf]
      %v324 = vunpack.c.l.b16 %v320
      %v325 = vunpack.c.l.b16 %v321
      %v326 = vpack.c.b16 %v325, %v324
      %v329 = vsel %vm217, %v315, 0
      %v332 = vsel %vm217, %v316, 0
      %v335 = vsel %vm217, %v317, 0
      %v338 = vsel %vm217, %v318, 0
      %340 = vmatpush.bf16.msra.mxu0 0
      %341 = vmatpush.bf16.msra.mxu0 0
      %342 = vmatpush.bf16.msra.mxu0 0
      %343 = vmatpush.bf16.msra.mxu0 0
      %344 = vmatpush.bf16.msra.mxu0 0
      %345 = vmatpush.bf16.msra.mxu0 0
      %346 = vmatpush.bf16.msra.mxu0 0
      %347 = vmatpush.bf16.msra.mxu0 %v326
      %348 = vmatmul.bf16.gmra.mxu0 %v329
      %v349 = vpop.f32.mrf.mxu0
      %v350 = vadd.f32 0.0, %v349
      %v351 = vpop.f32.mrf.mxu0
      %v352 = vadd.f32 0.0, %v351
      %353 = vmatmul.bf16.gmra.mxu0 %v332
      %v354 = vpop.f32.mrf.mxu0
      %v355 = vadd.f32 0.0, %v354
      %v356 = vpop.f32.mrf.mxu0
      %v357 = vadd.f32 0.0, %v356
      %358 = vmatmul.bf16.gmra.mxu0 %v335
      %v359 = vpop.f32.mrf.mxu0
      %v360 = vadd.f32 0.0, %v359
      %v361 = vpop.f32.mrf.mxu0
      %v362 = vadd.f32 0.0, %v361
      %363 = vmatmul.bf16.gmra.mxu0 %v338
      %v364 = vpop.f32.mrf.mxu0
      %v365 = vadd.f32 0.0, %v364
      %v366 = vpop.f32.mrf.mxu0
      %v367 = vadd.f32 0.0, %v366
      %368 = vdwg.mxu0
      %v369 = vadd.f32 %v287, %v350
      %v370 = vadd.f32 %v289, %v352
      %v371 = vadd.f32 %v292, %v355
      %v372 = vadd.f32 %v294, %v357
      %v373 = vadd.f32 %v297, %v360
      %v374 = vadd.f32 %v299, %v362
      %v375 = vadd.f32 %v302, %v365
      %v376 = vadd.f32 %v304, %v367
      %v377 = vld [vmem:[%s306 + $0x1] sm:$0xff]
      %v378 = vld [vmem:[%s306 + $0x11] sm:$0xff]
      %v379 = vld [vmem:[%s306 + $0x21] sm:$0xff]
      %v380 = vld [vmem:[%s306 + $0x31] sm:$0xff]
      %v381 = vld [vmem:[%s306 + $0x41] sm:$0xff]
      %v382 = vld [vmem:[%s306 + $0x51] sm:$0xff]
      %v383 = vld [vmem:[%s306 + $0x61] sm:$0xff]
      %v384 = vld [vmem:[%s306 + $0x71] sm:$0xff]
      %v385 = vpack.c.bf16 %v378, %v377
      %v386 = vpack.c.bf16 %v380, %v379
      %v387 = vpack.c.bf16 %v382, %v381
      %v388 = vpack.c.bf16 %v384, %v383
      %s389 = scalar_lea.vmem %s172, 24
      %v390 = vld [vmem:[%s389] sm:$0xf]
      %v391 = vld [vmem:[%s389 + $0x4] sm:$0xf]
      %v394 = vunpack.c.l.b16 %v390
      %v395 = vunpack.c.l.b16 %v391
      %v396 = vpack.c.b16 %v395, %v394
      %v399 = vsel %vm217, %v385, 0
      %v402 = vsel %vm217, %v386, 0
      %v405 = vsel %vm217, %v387, 0
      %v408 = vsel %vm217, %v388, 0
      %410 = vmatpush.bf16.msra.mxu0 0
      %411 = vmatpush.bf16.msra.mxu0 0
      %412 = vmatpush.bf16.msra.mxu0 0
      %413 = vmatpush.bf16.msra.mxu0 0
      %414 = vmatpush.bf16.msra.mxu0 0
      %415 = vmatpush.bf16.msra.mxu0 0
      %416 = vmatpush.bf16.msra.mxu0 0
      %417 = vmatpush.bf16.msra.mxu0 %v396
      %418 = vmatmul.bf16.gmra.mxu0 %v399
      %v419 = vpop.f32.mrf.mxu0
      %v420 = vadd.f32 0.0, %v419
      %v421 = vpop.f32.mrf.mxu0
      %v422 = vadd.f32 0.0, %v421
      %423 = vmatmul.bf16.gmra.mxu0 %v402
      %v424 = vpop.f32.mrf.mxu0
      %v425 = vadd.f32 0.0, %v424
      %v426 = vpop.f32.mrf.mxu0
      %v427 = vadd.f32 0.0, %v426
      %428 = vmatmul.bf16.gmra.mxu0 %v405
      %v429 = vpop.f32.mrf.mxu0
      %v430 = vadd.f32 0.0, %v429
      %v431 = vpop.f32.mrf.mxu0
      %v432 = vadd.f32 0.0, %v431
      %433 = vmatmul.bf16.gmra.mxu0 %v408
      %v434 = vpop.f32.mrf.mxu0
      %v435 = vadd.f32 0.0, %v434
      %v436 = vpop.f32.mrf.mxu0
      %v437 = vadd.f32 0.0, %v436
      %438 = vdwg.mxu0
      %v439 = vadd.f32 %v369, %v420
      %v440 = vadd.f32 %v370, %v422
      %v441 = vadd.f32 %v371, %v425
      %v442 = vadd.f32 %v372, %v427
      %v443 = vadd.f32 %v373, %v430
      %v444 = vadd.f32 %v374, %v432
      %v445 = vadd.f32 %v375, %v435
      %v446 = vadd.f32 %v376, %v437
      %447 = vst [vmem:[%s180] sm:$0xff] %v439
      %448 = vst [vmem:[%s180 + $0x8] sm:$0xff] %v440
      %449 = vst [vmem:[%s180 + $0x10] sm:$0xff] %v441
      %450 = vst [vmem:[%s180 + $0x18] sm:$0xff] %v442
      %451 = vst [vmem:[%s180 + $0x20] sm:$0xff] %v443
      %452 = vst [vmem:[%s180 + $0x28] sm:$0xff] %v444
      %453 = vst [vmem:[%s180 + $0x30] sm:$0xff] %v445
      %454 = vst [vmem:[%s180 + $0x38] sm:$0xff] %v446
      %p455 = scmp.lt.s32.totalorder %s17, 1
      %s456 = scalar_select %p455, %s17, 1
      %p457 = scmp.lt.s32.totalorder %s18, 0
      %s458 = scalar_select %p457, %s18, 0
      %s459 = smul.addr %s456, 8
      %s460 = sadd.s32 %s458, %s459
      %s461 = smul.addr %s460, 8
      %s462 = scalar_lea.vmem %s2, %s461
      // Predicated region
      $region29: #{unet_down_forward.2} parent=27 // pred_check
        %p463 = pneg %p97
      $region30: #{unet_down_forward.2} parent=27 // pred_check_branch
        %465 = sbr.rel (%p463) target = $region32
      $region31: #{unet_down_forward.2} parent=27 // pred_region
        _
      $region32: #{unet_down_forward.2} parent=27 // pred_fallthru
        _
    $region28: #{unet_down_forward.2} parent=5 // pred_fallthru
      _
    %p466 = scmp.le.s32.totalorder 2, %s8
    // Predicated region
    $region33: #{unet_down_forward.2} parent=5 // pred_check
      %p467 = pneg %p466
    $region34: #{unet_down_forward.2} parent=5 // pred_check_branch
      %469 = sbr.rel (%p467) target = $region36
    $region35: #{unet_down_forward.2} parent=5 // pred_region
      %s470 = ssub.s32 %s8, 2
      // Predicated region
      $region37: #{unet_down_forward.2} parent=35 // pred_check
        %p471 = pneg %p103
      $region38: #{unet_down_forward.2} parent=35 // pred_check_branch
        %473 = sbr.rel (%p471) target = $region40
      $region39: #{unet_down_forward.2} parent=35 // pred_region
        %p474 = scmp.lt.s32.totalorder %s19, 1
        %s475 = scalar_select %p474, %s19, 1
        %p476 = scmp.lt.s32.totalorder %s20, 0
        %s477 = scalar_select %p476, %s20, 0
        %s478 = smul.addr %s475, 8
        %s479 = sadd.s32 %s477, %s478
        %s480 = smul.addr %s479, 8
        %s481 = scalar_lea.vmem %s2, %s480
      $region40: #{unet_down_forward.2} parent=35 // pred_fallthru
        _
    $region36: #{unet_down_forward.2} parent=5 // pred_fallthru
      _
  $region6: #{unet_down_forward.2} parent=0 // loop_footer
    %s12 = sadd.s32 1, %s8
  $region7: #{unet_down_forward.2} parent=0 // loop_footer_branch
    %7 = sbr.rel target = $region3
  $region8: #{unet_down_forward.2} parent=0 // loop_exit
    _

// kernel: unet_down_forward.3
$region0: #{unet_down_forward.3}
  #allocation0 [shape = 'u32[]', space=smem, size = 0x4, offset = 0x4, fixed_abs, tag = 'smem constant byte address 0x4 - core index']
  #allocation1 [shape = 'u32[72,128]{1,0:T(1,128)}', space=vmem, size = 0x9000, scoped, tag = 'internal scratch']
  %s0 = inlined_call_operand.vmem [shape: f32[2,10,10,128], index: 0, kind: input, shape index: {}]
  %s1 = inlined_call_operand.vmem [shape: bf16[9,128,128], index: 1, kind: input, shape index: {}]
  %s2 = inlined_call_operand.vmem [shape: f32[1,128], index: 2, kind: input, shape index: {}]
  %s3 = inlined_call_operand.vmem [shape: f32[2,8,8,128], index: 3, kind: output, shape index: {}]
  %s4 = sld [smem:[#allocation0]]
  $region45: #{unet_down_forward.3} parent=0
    _
  %s6 = ssub.s32 1, %s4
  %s7 = scalar_select 0, %s6, %s4
  loop: start=0, step=1, limit=4
  $region2: #{unet_down_forward.3} parent=0 // loop_pre_header
    _
  $region3: #{unet_down_forward.3} parent=0 // loop_header
    %s9 = sphi 0, %s13
    %p10 = scmp.ge.s32.totalorder %s9, 4
    %s16 = sphi 0, %s28
    %s17 = sphi 0, %s24
    %s18 = sphi 0, %s16
    %s19 = sphi 0, %s17
    %s20 = sphi 0, %s18
    %s21 = sphi 0, %s19
    %s31 = sphi 0, %s33
    %s34 = sphi 0, %s31
    %s35 = sphi 0, %s34
    %s51 = sphi 0, %s35
    %s57 = sphi 0, %s59
    %s60 = sphi 0, %s57
    %s61 = sphi 0, %s60
    %s77 = sphi 0, %s61
    %s83 = sphi 0, %s85
    %s86 = sphi 0, %s83
    %s87 = sphi 0, %s86
    %s103 = sphi 0, %s87
    %s111 = sphi 0, %s113
    %s114 = sphi 0, %s111
    %s115 = sphi 0, %s114
    %s131 = sphi 0, %s115
  $region4: #{unet_down_forward.3} parent=0 // loop_header_branch
    %12 = sbr.rel (%p10) target = $region8
  $region5: #{unet_down_forward.3} parent=0 // loop_body
    %s14 = ssub.s32 %s9, 1
    %s15 = ssub.s32 %s9, 2
    %s22 = sadd.s32 1, %s17
    %p23 = scmp.ge.s32.totalorder %s22, 1
    %s24 = scalar_select %p23, 0, %s22
    %s25 = sadd.s32 1, %s16
    %s26 = scalar_select %p23, %s25, %s16
    %p27 = scmp.ge.s32.totalorder %s26, 2
    %s28 = scalar_select %p27, 0, %s26
    %s29 = ssub.s32 %s16, %s28
    %p30 = scmp.eq.s32.totalorder %s29, 0
    %s32 = sadd.s32 %s31, 1
    %s33 = scalar_select %p30, %s31, %s32
    %p36 = pneg %p30
    %p37 = scmp.eq.s32.totalorder %s9, 1
    %p38 = por %p36, %p37
    %p39 = scmp.ne.s32.totalorder %s31, %s34
    %p40 = scmp.eq.s32.totalorder %s9, 0
    %p41 = por %p39, %p40
    %p42 = scmp.ne.s32.totalorder %s31, %s34
    %p43 = scmp.eq.s32.totalorder %s14, 1
    %p44 = por %p42, %p43
    %p45 = scmp.ne.s32.totalorder %s34, %s35
    %p46 = scmp.eq.s32.totalorder %s14, 0
    %p47 = por %p45, %p46
    %p48 = scmp.ne.s32.totalorder %s34, %s35
    %p49 = scmp.eq.s32.totalorder %s15, 1
    %p50 = por %p48, %p49
    %p52 = scmp.ne.s32.totalorder %s35, %s51
    %p53 = scmp.eq.s32.totalorder %s15, 0
    %p54 = por %p52, %p53
    %s55 = ssub.s32 %s17, %s24
    %p56 = scmp.eq.s32.totalorder %s55, 0
    %s58 = sadd.s32 %s57, 1
    %s59 = scalar_select %p56, %s57, %s58
    %p62 = pneg %p56
    %p63 = scmp.eq.s32.totalorder %s9, 1
    %p64 = por %p62, %p63
    %p65 = scmp.ne.s32.totalorder %s57, %s60
    %p66 = scmp.eq.s32.totalorder %s9, 0
    %p67 = por %p65, %p66
    %p68 = scmp.ne.s32.totalorder %s57, %s60
    %p69 = scmp.eq.s32.totalorder %s14, 1
    %p70 = por %p68, %p69
    %p71 = scmp.ne.s32.totalorder %s60, %s61
    %p72 = scmp.eq.s32.totalorder %s14, 0
    %p73 = por %p71, %p72
    %p74 = scmp.ne.s32.totalorder %s60, %s61
    %p75 = scmp.eq.s32.totalorder %s15, 1
    %p76 = por %p74, %p75
    %p78 = scmp.ne.s32.totalorder %s61, %s77
    %p79 = scmp.eq.s32.totalorder %s15, 0
    %p80 = por %p78, %p79
    %s81 = ssub.s32 %s17, %s24
    %p82 = scmp.eq.s32.totalorder %s81, 0
    %s84 = sadd.s32 %s83, 1
    %s85 = scalar_select %p82, %s83, %s84
    %p88 = pneg %p82
    %p89 = scmp.eq.s32.totalorder %s9, 1
    %p90 = por %p88, %p89
    %p91 = scmp.ne.s32.totalorder %s83, %s86
    %p92 = scmp.eq.s32.totalorder %s9, 0
    %p93 = por %p91, %p92
    %p94 = scmp.ne.s32.totalorder %s83, %s86
    %p95 = scmp.eq.s32.totalorder %s14, 1
    %p96 = por %p94, %p95
    %p97 = scmp.ne.s32.totalorder %s86, %s87
    %p98 = scmp.eq.s32.totalorder %s14, 0
    %p99 = por %p97, %p98
    %p100 = scmp.ne.s32.totalorder %s86, %s87
    %p101 = scmp.eq.s32.totalorder %s15, 1
    %p102 = por %p100, %p101
    %p104 = scmp.ne.s32.totalorder %s87, %s103
    %p105 = scmp.eq.s32.totalorder %s15, 0
    %p106 = por %p104, %p105
    %s107 = ssub.s32 %s16, %s28
    %s108 = ssub.s32 %s17, %s24
    %s109 = sor.u32 %s107, %s108
    %p110 = scmp.eq.s32.totalorder %s109, 0
    %s112 = sadd.s32 %s111, 1
    %s113 = scalar_select %p110, %s111, %s112
    %p116 = pneg %p110
    %p117 = scmp.eq.s32.totalorder %s9, 1
    %p118 = por %p116, %p117
    %p119 = scmp.ne.s32.totalorder %s111, %s114
    %p120 = scmp.eq.s32.totalorder %s9, 0
    %p121 = por %p119, %p120
    %p122 = scmp.ne.s32.totalorder %s111, %s114
    %p123 = scmp.eq.s32.totalorder %s14, 1
    %p124 = por %p122, %p123
    %p125 = scmp.ne.s32.totalorder %s114, %s115
    %p126 = scmp.eq.s32.totalorder %s14, 0
    %p127 = por %p125, %p126
    %p128 = scmp.ne.s32.totalorder %s114, %s115
    %p129 = scmp.eq.s32.totalorder %s15, 1
    %p130 = por %p128, %p129
    %p132 = scmp.ne.s32.totalorder %s115, %s131
    %p133 = scmp.eq.s32.totalorder %s15, 0
    %p134 = por %p132, %p133
    %p135 = scmp.le.s32.totalorder 1, %s9
    %p136 = scmp.lt.s32.totalorder %s9, 3
    %p137 = pnand %p135, %p136
    %p138 = pneg %p137
    // Predicated region
    $region9: #{unet_down_forward.3} parent=5 // pred_check
      _
    $region10: #{unet_down_forward.3} parent=5 // pred_check_branch
      %140 = sbr.rel (%p137) target = $region12
    $region11: #{unet_down_forward.3} parent=5 // pred_region
      %s141 = ssub.s32 %s9, 1
      // Predicated region
      $region13: #{unet_down_forward.3} parent=11 // pred_check
        %p142 = pneg %p73
      $region14: #{unet_down_forward.3} parent=11 // pred_check_branch
        %144 = sbr.rel (%p142) target = $region16
      $region15: #{unet_down_forward.3} parent=11 // pred_region
        %p145 = scmp.lt.s32.totalorder %s19, 0
        %s146 = scalar_select %p145, %s19, 0
        %s147 = smul.addr %s146, 4
        %s148 = scalar_lea.vmem %s1, %s147
      $region16: #{unet_down_forward.3} parent=11 // pred_fallthru
        _
      // Predicated region
      $region17: #{unet_down_forward.3} parent=11 // pred_check
        %p149 = pneg %p99
      $region18: #{unet_down_forward.3} parent=11 // pred_check_branch
        %151 = sbr.rel (%p149) target = $region20
      $region19: #{unet_down_forward.3} parent=11 // pred_region
        %p152 = scmp.lt.s32.totalorder %s19, 0
        %s153 = scalar_select %p152, %s19, 0
        %s154 = scalar_lea.vmem %s2, %s153
      $region20: #{unet_down_forward.3} parent=11 // pred_fallthru
        _
    $region12: #{unet_down_forward.3} parent=5 // pred_fallthru
      _
    %p155 = scmp.lt.s32.totalorder %s9, 2
    // Predicated region
    $region21: #{unet_down_forward.3} parent=5 // pred_check
      %p156 = pneg %p155
    $region22: #{unet_down_forward.3} parent=5 // pred_check_branch
      %158 = sbr.rel (%p156) target = $region24
    $region23: #{unet_down_forward.3} parent=5 // pred_region
      // Predicated region
      $region25: #{unet_down_forward.3} parent=23 // pred_check
        %p159 = pneg %p41
      $region26: #{unet_down_forward.3} parent=23 // pred_check_branch
        %161 = sbr.rel (%p159) target = $region28
      $region27: #{unet_down_forward.3} parent=23 // pred_region
        %p162 = scmp.lt.s32.totalorder %s16, 1
        %s163 = scalar_select %p162, %s16, 1
        %s164 = smul.addr %s163, 20
        %s165 = smul.addr %s164, 8
        %s166 = scalar_lea.vmem %s0, %s165
      $region28: #{unet_down_forward.3} parent=23 // pred_fallthru
        _
    $region24: #{unet_down_forward.3} parent=5 // pred_fallthru
      _
    %p167 = scmp.le.s32.totalorder 1, %s9
    %p168 = scmp.lt.s32.totalorder %s9, 3
    %p169 = pnand %p167, %p168
    %p170 = pneg %p169
    // Predicated region
    $region29: #{unet_down_forward.3} parent=5 // pred_check
      _
    $region30: #{unet_down_forward.3} parent=5 // pred_check_branch
      %172 = sbr.rel (%p169) target = $region32
    $region31: #{unet_down_forward.3} parent=5 // pred_region
      %s173 = ssub.s32 %s9, 1
      %p174 = scmp.lt.s32.totalorder %s18, 1
      %s175 = scalar_select %p174, %s18, 1
      %s176 = smul.addr %s175, 20
      %s177 = smul.addr %s176, 8
      %s178 = scalar_lea.vmem %s0, %s177
      %p179 = pneg %p47
      %p180 = pneg %p44
      %p181 = scmp.lt.s32.totalorder %s19, 0
      %s182 = scalar_select %p181, %s19, 0
      %s183 = smul.addr %s182, 4
      %s184 = scalar_lea.vmem %s1, %s183
      %p185 = pneg %p73
      %p186 = pneg %p70
      %p187 = scmp.lt.s32.totalorder %s19, 0
      %s188 = scalar_select %p187, %s19, 0
      %s189 = scalar_lea.vmem %s2, %s188
      %p190 = pneg %p99
      %p191 = pneg %p96
      %p192 = pneg %p127
      %p193 = pneg %p124
      %p194 = scmp.lt.s32.totalorder %s18, 1
      %s195 = scalar_select %p194, %s18, 1
      %p196 = scmp.lt.s32.totalorder %s19, 0
      %s197 = scalar_select %p196, %s19, 0
      %s198 = smul.addr %s195, 8
      %s199 = sadd.s32 %s197, %s198
      %s200 = smul.addr %s199, 8
      %s201 = scalar_lea.vmem %s3, %s200
      %p202 = scmp.lt.s32.totalorder %s18, 1
      %s203 = scalar_select %p202, %s18, 1
      %s204 = smul.addr %s203, 20
      %s205 = smul.addr %s204, 8
      %s206 = scalar_lea.vmem %s0, %s205
      %p207 = scmp.lt.s32.totalorder %s19, 0
      %s208 = scalar_select %p207, %s19, 0
      %s209 = smul.addr %s208, 4
      %s210 = scalar_lea.vmem %s1, %s209
      %p211 = scmp.lt.s32.totalorder %s19, 0
      %s212 = scalar_select %p211, %s19, 0
      %s213 = scalar_lea.vmem %s2, %s212
      %p214 = scmp.lt.s32.totalorder %s18, 1
      %s215 = scalar_select %p214, %s18, 1
      %p216 = scmp.lt.s32.totalorder %s19, 0
      %s217 = scalar_select %p216, %s19, 0
      %s218 = smul.addr %s215, 8
      %s219 = sadd.s32 %s217, %s218
      %s220 = smul.addr %s219, 8
      %s221 = scalar_lea.vmem %s3, %s220
      %v222 = vld [vmem:[%s206] sm:$0xff]
      %v223 = vld [vmem:[%s206 + $0x10] sm:$0xff]
      %v224 = vld [vmem:[%s206 + $0x20] sm:$0xff]
      %v225 = vld [vmem:[%s206 + $0x30] sm:$0xff]
      %v226 = vld [vmem:[%s206 + $0x40] sm:$0xff]
      %v227 = vld [vmem:[%s206 + $0x50] sm:$0xff]
      %v228 = vld [vmem:[%s206 + $0x60] sm:$0xff]
      %v229 = vld [vmem:[%s206 + $0x70] sm:$0xff]
      %v230 = vpack.c.bf16 %v223, %v222
      %v231 = vpack.c.bf16 %v225, %v224
      %v232 = vpack.c.bf16 %v227, %v226
      %v233 = vpack.c.bf16 %v229, %v228
      %v234 = vld [vmem:[%s210] sm:$0xf]
      %v235 = vld [vmem:[%s210 + $0x4] sm:$0xf]
      %v236 = vld [vmem:[%s210 + $0x8] sm:$0xf]
      %v237 = vld [vmem:[%s210 + $0xc] sm:$0xf]
      %v238 = vld [vmem:[%s210 + $0x10] sm:$0xf]
      %v239 = vld [vmem:[%s210 + $0x14] sm:$0xf]
      %v240 = vld [vmem:[%s210 + $0x18] sm:$0xf]
      %v241 = vld [vmem:[%s210 + $0x1c] sm:$0xf]
      %v242 = vld [vmem:[%s210 + $0x20] sm:$0xf]
      %v243 = vld [vmem:[%s210 + $0x24] sm:$0xf]
      %v244 = vld [vmem:[%s210 + $0x28] sm:$0xf]
      %v245 = vld [vmem:[%s210 + $0x2c] sm:$0xf]
      %v246 = vld [vmem:[%s210 + $0x30] sm:$0xf]
      %v247 = vld [vmem:[%s210 + $0x34] sm:$0xf]
      %v248 = vld [vmem:[%s210 + $0x38] sm:$0xf]
      %v249 = vld [vmem:[%s210 + $0x3c] sm:$0xf]
      %v250 = vld [vmem:[%s206 + $0x1] sm:$0xff]
      %v251 = vld [vmem:[%s206 + $0x11] sm:$0xff]
      %v252 = vld [vmem:[%s206 + $0x21] sm:$0xff]
      %v253 = vld [vmem:[%s206 + $0x31] sm:$0xff]
      %v254 = vld [vmem:[%s206 + $0x41] sm:$0xff]
      %v255 = vld [vmem:[%s206 + $0x51] sm:$0xff]
      %v256 = vld [vmem:[%s206 + $0x61] sm:$0xff]
      %v257 = vld [vmem:[%s206 + $0x71] sm:$0xff]
      %v258 = vpack.c.bf16 %v251, %v250
      %v259 = vpack.c.bf16 %v253, %v252
      %v260 = vpack.c.bf16 %v255, %v254
      %v261 = vpack.c.bf16 %v257, %v256
      %s262 = scalar_lea.vmem %s210, 64
      %v263 = vld [vmem:[%s262] sm:$0xf]
      %v264 = vld [vmem:[%s262 + $0x4] sm:$0xf]
      %v265 = vld [vmem:[%s262 + $0x8] sm:$0xf]
      %v266 = vld [vmem:[%s262 + $0xc] sm:$0xf]
      %v267 = vld [vmem:[%s262 + $0x10] sm:$0xf]
      %v268 = vld [vmem:[%s262 + $0x14] sm:$0xf]
      %v269 = vld [vmem:[%s262 + $0x18] sm:$0xf]
      %v270 = vld [vmem:[%s262 + $0x1c] sm:$0xf]
      %v271 = vld [vmem:[%s262 + $0x20] sm:$0xf]
      %v272 = vld [vmem:[%s262 + $0x24] sm:$0xf]
      %v273 = vld [vmem:[%s262 + $0x28] sm:$0xf]
      %v274 = vld [vmem:[%s262 + $0x2c] sm:$0xf]
      %v275 = vld [vmem:[%s262 + $0x30] sm:$0xf]
      %v276 = vld [vmem:[%s262 + $0x34] sm:$0xf]
      %v277 = vld [vmem:[%s262 + $0x38] sm:$0xf]
      %v278 = vld [vmem:[%s262 + $0x3c] sm:$0xf]
      %v295 = vunpack.c.l.b16 %v263
      %v296 = vunpack.c.l.b16 %v264
      %v297 = vunpack.c.l.b16 %v265
      %v298 = vunpack.c.l.b16 %v266
      %v299 = vunpack.c.l.b16 %v267
      %v300 = vunpack.c.l.b16 %v268
      %v301 = vunpack.c.l.b16 %v269
      %v302 = vunpack.c.l.b16 %v270
      %v303 = vunpack.c.l.b16 %v271
      %v304 = vunpack.c.l.b16 %v272
      %v305 = vunpack.c.l.b16 %v273
      %v306 = vunpack.c.l.b16 %v274
      %v307 = vunpack.c.l.b16 %v275
      %v308 = vunpack.c.l.b16 %v276
      %v309 = vunpack.c.l.b16 %v277
      %v310 = vunpack.c.l.b16 %v278
      %v311 = vpack.c.b16 %v296, %v295
      %v312 = vpack.c.b16 %v298, %v297
      %v313 = vpack.c.b16 %v300, %v299
      %v314 = vpack.c.b16 %v302, %v301
      %v315 = vpack.c.b16 %v304, %v303
      %v316 = vpack.c.b16 %v306, %v305
      %v317 = vpack.c.b16 %v308, %v307
      %v318 = vpack.c.b16 %v310, %v309
      %327 = vmatpush.bf16.msra.mxu0 %v318
      %328 = vmatpush.bf16.msra.mxu0 %v317
      %329 = vmatpush.bf16.msra.mxu0 %v316
      %330 = vmatpush.bf16.msra.mxu0 %v315
      %331 = vmatpush.bf16.msra.mxu0 %v314
      %332 = vmatpush.bf16.msra.mxu0 %v313
      %333 = vmatpush.bf16.msra.mxu0 %v312
      %334 = vmatpush.bf16.msra.mxu0 %v311
      %335 = vmatmul.bf16.gmra.mxu0 %v258
      %v336 = vpop.f32.mrf.mxu0
      %v337 = vadd.f32 0.0, %v336
      %v338 = vpop.f32.mrf.mxu0
      %v339 = vadd.f32 0.0, %v338
      %340 = vmatmul.bf16.gmra.mxu0 %v259
      %v341 = vpop.f32.mrf.mxu0
      %v342 = vadd.f32 0.0, %v341
      %v343 = vpop.f32.mrf.mxu0
      %v344 = vadd.f32 0.0, %v343
      %345 = vmatmul.bf16.gmra.mxu0 %v260
      %v346 = vpop.f32.mrf.mxu0
      %v347 = vadd.f32 0.0, %v346
      %v348 = vpop.f32.mrf.mxu0
      %v349 = vadd.f32 0.0, %v348
      %350 = vmatmul.bf16.gmra.mxu0 %v261
      %v351 = vpop.f32.mrf.mxu0
      %v352 = vadd.f32 0.0, %v351
      %v353 = vpop.f32.mrf.mxu0
      %v354 = vadd.f32 0.0, %v353
      %355 = vdwg.mxu0
      %v372 = vunpack.c.l.b16 %v234
      %v373 = vunpack.c.l.b16 %v235
      %v374 = vunpack.c.l.b16 %v236
      %v375 = vunpack.c.l.b16 %v237
      %v376 = vunpack.c.l.b16 %v238
      %v377 = vunpack.c.l.b16 %v239
      %v378 = vunpack.c.l.b16 %v240
      %v379 = vunpack.c.l.b16 %v241
      %v380 = vunpack.c.l.b16 %v242
      %v381 = vunpack.c.l.b16 %v243
      %v382 = vunpack.c.l.b16 %v244
      %v383 = vunpack.c.l.b16 %v245
      %v384 = vunpack.c.l.b16 %v246
      %v385 = vunpack.c.l.b16 %v247
      %v386 = vunpack.c.l.b16 %v248
      %v387 = vunpack.c.l.b16 %v249
      %v388 = vpack.c.b16 %v373, %v372
      %v389 = vpack.c.b16 %v375, %v374
      %v390 = vpack.c.b16 %v377, %v376
      %v391 = vpack.c.b16 %v379, %v378
      %v392 = vpack.c.b16 %v381, %v380
      %v393 = vpack.c.b16 %v383, %v382
      %v394 = vpack.c.b16 %v385, %v384
      %v395 = vpack.c.b16 %v387, %v386
      %404 = vmatpush.bf16.msra.mxu0 %v395
      %405 = vmatpush.bf16.msra.mxu0 %v394
      %406 = vmatpush.bf16.msra.mxu0 %v393
      %407 = vmatpush.bf16.msra.mxu0 %v392
      %408 = vmatpush.bf16.msra.mxu0 %v391
      %409 = vmatpush.bf16.msra.mxu0 %v390
      %410 = vmatpush.bf16.msra.mxu0 %v389
      %411 = vmatpush.bf16.msra.mxu0 %v388
      %412 = vmatmul.bf16.gmra.mxu0 %v230
      %v413 = vpop.f32.mrf.mxu0
      %v414 = vadd.f32 %v337, %v413
      %v415 = vpop.f32.mrf.mxu0
      %v416 = vadd.f32 %v339, %v415
      %417 = vmatmul.bf16.gmra.mxu0 %v231
      %v418 = vpop.f32.mrf.mxu0
      %v419 = vadd.f32 %v342, %v418
      %v420 = vpop.f32.mrf.mxu0
      %v421 = vadd.f32 %v344, %v420
      %422 = vmatmul.bf16.gmra.mxu0 %v232
      %v423 = vpop.f32.mrf.mxu0
      %v424 = vadd.f32 %v347, %v423
      %v425 = vpop.f32.mrf.mxu0
      %v426 = vadd.f32 %v349, %v425
      %427 = vmatmul.bf16.gmra.mxu0 %v233
      %v428 = vpop.f32.mrf.mxu0
      %v429 = vadd.f32 %v352, %v428
      %v430 = vpop.f32.mrf.mxu0
      %v431 = vadd.f32 %v354, %v430
      %432 = vdwg.mxu0
      %v433 = vld [vmem:[%s206 + $0x2] sm:$0xff]
      %v434 = vld [vmem:[%s206 + $0x12] sm:$0xff]
      %v435 = vld [vmem:[%s206 + $0x22] sm:$0xff]
      %v436 = vld [vmem:[%s206 + $0x32] sm:$0xff]
      %v437 = vld [vmem:[%s206 + $0x42] sm:$0xff]
      %v438 = vld [vmem:[%s206 + $0x52] sm:$0xff]
      %v439 = vld [vmem:[%s206 + $0x62] sm:$0xff]
      %v440 = vld [vmem:[%s206 + $0x72] sm:$0xff]
      %v441 = vpack.c.bf16 %v434, %v433
      %v442 = vpack.c.bf16 %v436, %v435
      %v443 = vpack.c.bf16 %v438, %v437
      %v444 = vpack.c.bf16 %v440, %v439
      %s445 = scalar_lea.vmem %s210, 128
      %v446 = vld [vmem:[%s445] sm:$0xf]
      %v447 = vld [vmem:[%s445 + $0x4] sm:$0xf]
      %v448 = vld [vmem:[%s445 + $0x8] sm:$0xf]
      %v449 = vld [vmem:[%s445 + $0xc] sm:$0xf]
      %v450 = vld [vmem:[%s445 + $0x10] sm:$0xf]
      %v451 = vld [vmem:[%s445 + $0x14] sm:$0xf]
      %v452 = vld [vmem:[%s445 + $0x18] sm:$0xf]
      %v453 = vld [vmem:[%s445 + $0x1c] sm:$0xf]
      %v454 = vld [vmem:[%s445 + $0x20] sm:$0xf]
      %v455 = vld [vmem:[%s445 + $0x24] sm:$0xf]
      %v456 = vld [vmem:[%s445 + $0x28] sm:$0xf]
      %v457 = vld [vmem:[%s445 + $0x2c] sm:$0xf]
      %v458 = vld [vmem:[%s445 + $0x30] sm:$0xf]
      %v459 = vld [vmem:[%s445 + $0x34] sm:$0xf]
      %v460 = vld [vmem:[%s445 + $0x38] sm:$0xf]
      %v461 = vld [vmem:[%s445 + $0x3c] sm:$0xf]
      %v478 = vunpack.c.l.b16 %v446
      %v479 = vunpack.c.l.b16 %v447
      %v480 = vunpack.c.l.b16 %v448
      %v481 = vunpack.c.l.b16 %v449
      %v482 = vunpack.c.l.b16 %v450
      %v483 = vunpack.c.l.b16 %v451
      %v484 = vunpack.c.l.b16 %v452
      %v485 = vunpack.c.l.b16 %v453
      %v486 = vunpack.c.l.b16 %v454
      %v487 = vunpack.c.l.b16 %v455
      %v488 = vunpack.c.l.b16 %v456
      %v489 = vunpack.c.l.b16 %v457
      %v490 = vunpack.c.l.b16 %v458
      %v491 = vunpack.c.l.b16 %v459
      %v492 = vunpack.c.l.b16 %v460
      %v493 = vunpack.c.l.b16 %v461
      %v494 = vpack.c.b16 %v479, %v478
      %v495 = vpack.c.b16 %v481, %v480
      %v496 = vpack.c.b16 %v483, %v482
      %v497 = vpack.c.b16 %v485, %v484
      %v498 = vpack.c.b16 %v487, %v486
      %v499 = vpack.c.b16 %v489, %v488
      %v500 = vpack.c.b16 %v491, %v490
      %v501 = vpack.c.b16 %v493, %v492
      %510 = vmatpush.bf16.msra.mxu0 %v501
      %511 = vmatpush.bf16.msra.mxu0 %v500
      %512 = vmatpush.bf16.msra.mxu0 %v499
      %513 = vmatpush.bf16.msra.mxu0 %v498
      %514 = vmatpush.bf16.msra.mxu0 %v497
      %515 = vmatpush.bf16.msra.mxu0 %v496
      %516 = vmatpush.bf16.msra.mxu0 %v495
      %517 = vmatpush.bf16.msra.mxu0 %v494
      %518 = vmatmul.bf16.gmra.mxu0 %v441
      %v519 = vpop.f32.mrf.mxu0
      %v520 = vadd.f32 0.0, %v519
      %v521 = vpop.f32.mrf.mxu0
      %v522 = vadd.f32 0.0, %v521
      %523 = vmatmul.bf16.gmra.mxu0 %v442
      %v524 = vpop.f32.mrf.mxu0
      %v525 = vadd.f32 0.0, %v524
      %v526 = vpop.f32.mrf.mxu0
      %v527 = vadd.f32 0.0, %v526
      %528 = vmatmul.bf16.gmra.mxu0 %v443
      %v529 = vpop.f32.mrf.mxu0
      %v530 = vadd.f32 0.0, %v529
      %v531 = vpop.f32.mrf.mxu0
      %v532 = vadd.f32 0.0, %v531
      %533 = vmatmul.bf16.gmra.mxu0 %v444
      %v534 = vpop.f32.mrf.mxu0
      %v535 = vadd.f32 0.0, %v534
      %v536 = vpop.f32.mrf.mxu0
      %v537 = vadd.f32 0.0, %v536
      %538 = vdwg.mxu0
      %v539 = vadd.f32 %v414, %v520
      %v540 = vadd.f32 %v416, %v522
      %v541 = vadd.f32 %v419, %v525
      %v542 = vadd.f32 %v421, %v527
      %v543 = vadd.f32 %v424, %v530
      %v544 = vadd.f32 %v426, %v532
      %v545 = vadd.f32 %v429, %v535
      %v546 = vadd.f32 %v431, %v537
      %s547 = scalar_lea.vmem %s206, 16
      %v548 = vld [vmem:[%s547] sm:$0xff]
      %v549 = vld [vmem:[%s547 + $0x10] sm:$0xff]
      %v550 = vld [vmem:[%s547 + $0x20] sm:$0xff]
      %v551 = vld [vmem:[%s547 + $0x30] sm:$0xff]
      %v552 = vld [vmem:[%s547 + $0x40] sm:$0xff]
      %v553 = vld [vmem:[%s547 + $0x50] sm:$0xff]
      %v554 = vld [vmem:[%s547 + $0x60] sm:$0xff]
      %v555 = vld [vmem:[%s547 + $0x70] sm:$0xff]
      %v556 = vpack.c.bf16 %v549, %v548
      %v557 = vpack.c.bf16 %v551, %v550
      %v558 = vpack.c.bf16 %v553, %v552
      %v559 = vpack.c.bf16 %v555, %v554
      %s560 = scalar_lea.vmem %s210, 192
      %v561 = vld [vmem:[%s560] sm:$0xf]
      %v562 = vld [vmem:[%s560 + $0x4] sm:$0xf]
      %v563 = vld [vmem:[%s560 + $0x8] sm:$0xf]
      %v564 = vld [vmem:[%s560 + $0xc] sm:$0xf]
      %v565 = vld [vmem:[%s560 + $0x10] sm:$0xf]
      %v566 = vld [vmem:[%s560 + $0x14] sm:$0xf]
      %v567 = vld [vmem:[%s560 + $0x18] sm:$0xf]
      %v568 = vld [vmem:[%s560 + $0x1c] sm:$0xf]
      %v569 = vld [vmem:[%s560 + $0x20] sm:$0xf]
      %v570 = vld [vmem:[%s560 + $0x24] sm:$0xf]
      %v571 = vld [vmem:[%s560 + $0x28] sm:$0xf]
      %v572 = vld [vmem:[%s560 + $0x2c] sm:$0xf]
      %v573 = vld [vmem:[%s560 + $0x30] sm:$0xf]
      %v574 = vld [vmem:[%s560 + $0x34] sm:$0xf]
      %v575 = vld [vmem:[%s560 + $0x38] sm:$0xf]
      %v576 = vld [vmem:[%s560 + $0x3c] sm:$0xf]
      %v593 = vunpack.c.l.b16 %v561
      %v594 = vunpack.c.l.b16 %v562
      %v595 = vunpack.c.l.b16 %v563
      %v596 = vunpack.c.l.b16 %v564
      %v597 = vunpack.c.l.b16 %v565
      %v598 = vunpack.c.l.b16 %v566
      %v599 = vunpack.c.l.b16 %v567
      %v600 = vunpack.c.l.b16 %v568
      %v601 = vunpack.c.l.b16 %v569
      %v602 = vunpack.c.l.b16 %v570
      %v603 = vunpack.c.l.b16 %v571
      %v604 = vunpack.c.l.b16 %v572
      %v605 = vunpack.c.l.b16 %v573
      %v606 = vunpack.c.l.b16 %v574
      %v607 = vunpack.c.l.b16 %v575
      %v608 = vunpack.c.l.b16 %v576
      %v609 = vpack.c.b16 %v594, %v593
      %v610 = vpack.c.b16 %v596, %v595
      %v611 = vpack.c.b16 %v598, %v597
      %v612 = vpack.c.b16 %v600, %v599
      %v613 = vpack.c.b16 %v602, %v601
      %v614 = vpack.c.b16 %v604, %v603
      %v615 = vpack.c.b16 %v606, %v605
      %v616 = vpack.c.b16 %v608, %v607
      %625 = vmatpush.bf16.msra.mxu0 %v616
      %626 = vmatpush.bf16.msra.mxu0 %v615
      %627 = vmatpush.bf16.msra.mxu0 %v614
      %628 = vmatpush.bf16.msra.mxu0 %v613
      %629 = vmatpush.bf16.msra.mxu0 %v612
      %630 = vmatpush.bf16.msra.mxu0 %v611
      %631 = vmatpush.bf16.msra.mxu0 %v610
      %632 = vmatpush.bf16.msra.mxu0 %v609
      %633 = vmatmul.bf16.gmra.mxu0 %v556
      %v634 = vpop.f32.mrf.mxu0
      %v635 = vadd.f32 0.0, %v634
      %v636 = vpop.f32.mrf.mxu0
      %v637 = vadd.f32 0.0, %v636
      %638 = vmatmul.bf16.gmra.mxu0 %v557
      %v639 = vpop.f32.mrf.mxu0
      %v640 = vadd.f32 0.0, %v639
      %v641 = vpop.f32.mrf.mxu0
      %v642 = vadd.f32 0.0, %v641
      %643 = vmatmul.bf16.gmra.mxu0 %v558
      %v644 = vpop.f32.mrf.mxu0
      %v645 = vadd.f32 0.0, %v644
      %v646 = vpop.f32.mrf.mxu0
      %v647 = vadd.f32 0.0, %v646
      %648 = vmatmul.bf16.gmra.mxu0 %v559
      %v649 = vpop.f32.mrf.mxu0
      %v650 = vadd.f32 0.0, %v649
      %v651 = vpop.f32.mrf.mxu0
      %v652 = vadd.f32 0.0, %v651
      %653 = vdwg.mxu0
      %v654 = vadd.f32 %v539, %v635
      %v655 = vadd.f32 %v540, %v637
      %v656 = vadd.f32 %v541, %v640
      %v657 = vadd.f32 %v542, %v642
      %v658 = vadd.f32 %v543, %v645
      %v659 = vadd.f32 %v544, %v647
      %v660 = vadd.f32 %v545, %v650
      %v661 = vadd.f32 %v546, %v652
      %v662 = vld [vmem:[%s547 + $0x1] sm:$0xff]
      %v663 = vld [vmem:[%s547 + $0x11] sm:$0xff]
      %v664 = vld [vmem:[%s547 + $0x21] sm:$0xff]
      %v665 = vld [vmem:[%s547 + $0x31] sm:$0xff]
      %v666 = vld [vmem:[%s547 + $0x41] sm:$0xff]
      %v667 = vld [vmem:[%s547 + $0x51] sm:$0xff]
      %v668 = vld [vmem:[%s547 + $0x61] sm:$0xff]
      %v669 = vld [vmem:[%s547 + $0x71] sm:$0xff]
      %v670 = vpack.c.bf16 %v663, %v662
      %v671 = vpack.c.bf16 %v665, %v664
      %v672 = vpack.c.bf16 %v667, %v666
      %v673 = vpack.c.bf16 %v669, %v668
      %s674 = scalar_lea.vmem %s210, 256
      %v675 = vld [vmem:[%s674] sm:$0xf]
      %v676 = vld [vmem:[%s674 + $0x4] sm:$0xf]
      %v677 = vld [vmem:[%s674 + $0x8] sm:$0xf]
      %v678 = vld [vmem:[%s674 + $0xc] sm:$0xf]
      %v679 = vld [vmem:[%s674 + $0x10] sm:$0xf]
      %v680 = vld [vmem:[%s674 + $0x14] sm:$0xf]
      %v681 = vld [vmem:[%s674 + $0x18] sm:$0xf]
      %v682 = vld [vmem:[%s674 + $0x1c] sm:$0xf]
      %v683 = vld [vmem:[%s674 + $0x20] sm:$0xf]
      %v684 = vld [vmem:[%s674 + $0x24] sm:$0xf]
      %v685 = vld [vmem:[%s674 + $0x28] sm:$0xf]
      %v686 = vld [vmem:[%s674 + $0x2c] sm:$0xf]
      %v687 = vld [vmem:[%s674 + $0x30] sm:$0xf]
      %v688 = vld [vmem:[%s674 + $0x34] sm:$0xf]
      %v689 = vld [vmem:[%s674 + $0x38] sm:$0xf]
      %v690 = vld [vmem:[%s674 + $0x3c] sm:$0xf]
      %v707 = vunpack.c.l.b16 %v675
      %v708 = vunpack.c.l.b16 %v676
      %v709 = vunpack.c.l.b16 %v677
      %v710 = vunpack.c.l.b16 %v678
      %v711 = vunpack.c.l.b16 %v679
      %v712 = vunpack.c.l.b16 %v680
      %v713 = vunpack.c.l.b16 %v681
      %v714 = vunpack.c.l.b16 %v682
      %v715 = vunpack.c.l.b16 %v683
      %v716 = vunpack.c.l.b16 %v684
      %v717 = vunpack.c.l.b16 %v685
      %v718 = vunpack.c.l.b16 %v686
      %v719 = vunpack.c.l.b16 %v687
      %v720 = vunpack.c.l.b16 %v688
      %v721 = vunpack.c.l.b16 %v689
      %v722 = vunpack.c.l.b16 %v690
      %v723 = vpack.c.b16 %v708, %v707
      %v724 = vpack.c.b16 %v710, %v709
      %v725 = vpack.c.b16 %v712, %v711
      %v726 = vpack.c.b16 %v714, %v713
      %v727 = vpack.c.b16 %v716, %v715
      %v728 = vpack.c.b16 %v718, %v717
      %v729 = vpack.c.b16 %v720, %v719
      %v730 = vpack.c.b16 %v722, %v721
      %739 = vmatpush.bf16.msra.mxu0 %v730
      %740 = vmatpush.bf16.msra.mxu0 %v729
      %741 = vmatpush.bf16.msra.mxu0 %v728
      %742 = vmatpush.bf16.msra.mxu0 %v727
      %743 = vmatpush.bf16.msra.mxu0 %v726
      %744 = vmatpush.bf16.msra.mxu0 %v725
      %745 = vmatpush.bf16.msra.mxu0 %v724
      %746 = vmatpush.bf16.msra.mxu0 %v723
      %747 = vmatmul.bf16.gmra.mxu0 %v670
      %v748 = vpop.f32.mrf.mxu0
      %v749 = vadd.f32 0.0, %v748
      %v750 = vpop.f32.mrf.mxu0
      %v751 = vadd.f32 0.0, %v750
      %752 = vmatmul.bf16.gmra.mxu0 %v671
      %v753 = vpop.f32.mrf.mxu0
      %v754 = vadd.f32 0.0, %v753
      %v755 = vpop.f32.mrf.mxu0
      %v756 = vadd.f32 0.0, %v755
      %757 = vmatmul.bf16.gmra.mxu0 %v672
      %v758 = vpop.f32.mrf.mxu0
      %v759 = vadd.f32 0.0, %v758
      %v760 = vpop.f32.mrf.mxu0
      %v761 = vadd.f32 0.0, %v760
      %762 = vmatmul.bf16.gmra.mxu0 %v673
      %v763 = vpop.f32.mrf.mxu0
      %v764 = vadd.f32 0.0, %v763
      %v765 = vpop.f32.mrf.mxu0
      %v766 = vadd.f32 0.0, %v765
      %767 = vdwg.mxu0
      %v768 = vadd.f32 %v654, %v749
      %v769 = vadd.f32 %v655, %v751
      %v770 = vadd.f32 %v656, %v754
      %v771 = vadd.f32 %v657, %v756
      %v772 = vadd.f32 %v658, %v759
      %v773 = vadd.f32 %v659, %v761
      %v774 = vadd.f32 %v660, %v764
      %v775 = vadd.f32 %v661, %v766
      %v776 = vld [vmem:[%s547 + $0x2] sm:$0xff]
      %v777 = vld [vmem:[%s547 + $0x12] sm:$0xff]
      %v778 = vld [vmem:[%s547 + $0x22] sm:$0xff]
      %v779 = vld [vmem:[%s547 + $0x32] sm:$0xff]
      %v780 = vld [vmem:[%s547 + $0x42] sm:$0xff]
      %v781 = vld [vmem:[%s547 + $0x52] sm:$0xff]
      %v782 = vld [vmem:[%s547 + $0x62] sm:$0xff]
      %v783 = vld [vmem:[%s547 + $0x72] sm:$0xff]
      %v784 = vpack.c.bf16 %v777, %v776
      %v785 = vpack.c.bf16 %v779, %v778
      %v786 = vpack.c.bf16 %v781, %v780
      %v787 = vpack.c.bf16 %v783, %v782
      %s788 = scalar_lea.vmem %s210, 320
      %v789 = vld [vmem:[%s788] sm:$0xf]
      %v790 = vld [vmem:[%s788 + $0x4] sm:$0xf]
      %v791 = vld [vmem:[%s788 + $0x8] sm:$0xf]
      %v792 = vld [vmem:[%s788 + $0xc] sm:$0xf]
      %v793 = vld [vmem:[%s788 + $0x10] sm:$0xf]
      %v794 = vld [vmem:[%s788 + $0x14] sm:$0xf]
      %v795 = vld [vmem:[%s788 + $0x18] sm:$0xf]
      %v796 = vld [vmem:[%s788 + $0x1c] sm:$0xf]
      %v797 = vld [vmem:[%s788 + $0x20] sm:$0xf]
      %v798 = vld [vmem:[%s788 + $0x24] sm:$0xf]
      %v799 = vld [vmem:[%s788 + $0x28] sm:$0xf]
      %v800 = vld [vmem:[%s788 + $0x2c] sm:$0xf]
      %v801 = vld [vmem:[%s788 + $0x30] sm:$0xf]
      %v802 = vld [vmem:[%s788 + $0x34] sm:$0xf]
      %v803 = vld [vmem:[%s788 + $0x38] sm:$0xf]
      %v804 = vld [vmem:[%s788 + $0x3c] sm:$0xf]
      %v821 = vunpack.c.l.b16 %v789
      %v822 = vunpack.c.l.b16 %v790
      %v823 = vunpack.c.l.b16 %v791
      %v824 = vunpack.c.l.b16 %v792
      %v825 = vunpack.c.l.b16 %v793
      %v826 = vunpack.c.l.b16 %v794
      %v827 = vunpack.c.l.b16 %v795
      %v828 = vunpack.c.l.b16 %v796
      %v829 = vunpack.c.l.b16 %v797
      %v830 = vunpack.c.l.b16 %v798
      %v831 = vunpack.c.l.b16 %v799
      %v832 = vunpack.c.l.b16 %v800
      %v833 = vunpack.c.l.b16 %v801
      %v834 = vunpack.c.l.b16 %v802
      %v835 = vunpack.c.l.b16 %v803
      %v836 = vunpack.c.l.b16 %v804
      %v837 = vpack.c.b16 %v822, %v821
      %v838 = vpack.c.b16 %v824, %v823
      %v839 = vpack.c.b16 %v826, %v825
      %v840 = vpack.c.b16 %v828, %v827
      %v841 = vpack.c.b16 %v830, %v829
      %v842 = vpack.c.b16 %v832, %v831
      %v843 = vpack.c.b16 %v834, %v833
      %v844 = vpack.c.b16 %v836, %v835
      %853 = vmatpush.bf16.msra.mxu0 %v844
      %854 = vmatpush.bf16.msra.mxu0 %v843
      %855 = vmatpush.bf16.msra.mxu0 %v842
      %856 = vmatpush.bf16.msra.mxu0 %v841
      %857 = vmatpush.bf16.msra.mxu0 %v840
      %858 = vmatpush.bf16.msra.mxu0 %v839
      %859 = vmatpush.bf16.msra.mxu0 %v838
      %860 = vmatpush.bf16.msra.mxu0 %v837
      %861 = vmatmul.bf16.gmra.mxu0 %v784
      %v862 = vpop.f32.mrf.mxu0
      %v863 = vadd.f32 0.0, %v862
      %v864 = vpop.f32.mrf.mxu0
      %v865 = vadd.f32 0.0, %v864
      %866 = vmatmul.bf16.gmra.mxu0 %v785
      %v867 = vpop.f32.mrf.mxu0
      %v868 = vadd.f32 0.0, %v867
      %v869 = vpop.f32.mrf.mxu0
      %v870 = vadd.f32 0.0, %v869
      %871 = vmatmul.bf16.gmra.mxu0 %v786
      %v872 = vpop.f32.mrf.mxu0
      %v873 = vadd.f32 0.0, %v872
      %v874 = vpop.f32.mrf.mxu0
      %v875 = vadd.f32 0.0, %v874
      %876 = vmatmul.bf16.gmra.mxu0 %v787
      %v877 = vpop.f32.mrf.mxu0
      %v878 = vadd.f32 0.0, %v877
      %v879 = vpop.f32.mrf.mxu0
      %v880 = vadd.f32 0.0, %v879
      %881 = vdwg.mxu0
      %v882 = vadd.f32 %v768, %v863
      %v883 = vadd.f32 %v769, %v865
      %v884 = vadd.f32 %v770, %v868
      %v885 = vadd.f32 %v771, %v870
      %v886 = vadd.f32 %v772, %v873
      %v887 = vadd.f32 %v773, %v875
      %v888 = vadd.f32 %v774, %v878
      %v889 = vadd.f32 %v775, %v880
      %s890 = scalar_lea.vmem %s206, 32
      %v891 = vld [vmem:[%s890] sm:$0xff]
      %v892 = vld [vmem:[%s890 + $0x10] sm:$0xff]
      %v893 = vld [vmem:[%s890 + $0x20] sm:$0xff]
      %v894 = vld [vmem:[%s890 + $0x30] sm:$0xff]
      %v895 = vld [vmem:[%s890 + $0x40] sm:$0xff]
      %v896 = vld [vmem:[%s890 + $0x50] sm:$0xff]
      %v897 = vld [vmem:[%s890 + $0x60] sm:$0xff]
      %v898 = vld [vmem:[%s890 + $0x70] sm:$0xff]
      %v899 = vpack.c.bf16 %v892, %v891
      %v900 = vpack.c.bf16 %v894, %v893
      %v901 = vpack.c.bf16 %v896, %v895
      %v902 = vpack.c.bf16 %v898, %v897
      %s903 = scalar_lea.vmem %s210, 384
      %v904 = vld [vmem:[%s903] sm:$0xf]
      %v905 = vld [vmem:[%s903 + $0x4] sm:$0xf]
      %v906 = vld [vmem:[%s903 + $0x8] sm:$0xf]
      %v907 = vld [vmem:[%s903 + $0xc] sm:$0xf]
      %v908 = vld [vmem:[%s903 + $0x10] sm:$0xf]
      %v909 = vld [vmem:[%s903 + $0x14] sm:$0xf]
      %v910 = vld [vmem:[%s903 + $0x18] sm:$0xf]
      %v911 = vld [vmem:[%s903 + $0x1c] sm:$0xf]
      %v912 = vld [vmem:[%s903 + $0x20] sm:$0xf]
      %v913 = vld [vmem:[%s903 + $0x24] sm:$0xf]
      %v914 = vld [vmem:[%s903 + $0x28] sm:$0xf]
      %v915 = vld [vmem:[%s903 + $0x2c] sm:$0xf]
      %v916 = vld [vmem:[%s903 + $0x30] sm:$0xf]
      %v917 = vld [vmem:[%s903 + $0x34] sm:$0xf]
      %v918 = vld [vmem:[%s903 + $0x38] sm:$0xf]
      %v919 = vld [vmem:[%s903 + $0x3c] sm:$0xf]
      %v936 = vunpack.c.l.b16 %v904
      %v937 = vunpack.c.l.b16 %v905
      %v938 = vunpack.c.l.b16 %v906
      %v939 = vunpack.c.l.b16 %v907
      %v940 = vunpack.c.l.b16 %v908
      %v941 = vunpack.c.l.b16 %v909
      %v942 = vunpack.c.l.b16 %v910
      %v943 = vunpack.c.l.b16 %v911
      %v944 = vunpack.c.l.b16 %v912
      %v945 = vunpack.c.l.b16 %v913
      %v946 = vunpack.c.l.b16 %v914
      %v947 = vunpack.c.l.b16 %v915
      %v948 = vunpack.c.l.b16 %v916
      %v949 = vunpack.c.l.b16 %v917
      %v950 = vunpack.c.l.b16 %v918
      %v951 = vunpack.c.l.b16 %v919
      %v952 = vpack.c.b16 %v937, %v936
      %v953 = vpack.c.b16 %v939, %v938
      %v954 = vpack.c.b16 %v941, %v940
      %v955 = vpack.c.b16 %v943, %v942
      %v956 = vpack.c.b16 %v945, %v944
      %v957 = vpack.c.b16 %v947, %v946
      %v958 = vpack.c.b16 %v949, %v948
      %v959 = vpack.c.b16 %v951, %v950
      %968 = vmatpush.bf16.msra.mxu0 %v959
      %969 = vmatpush.bf16.msra.mxu0 %v958
      %970 = vmatpush.bf16.msra.mxu0 %v957
      %971 = vmatpush.bf16.msra.mxu0 %v956
      %972 = vmatpush.bf16.msra.mxu0 %v955
      %973 = vmatpush.bf16.msra.mxu0 %v954
      %974 = vmatpush.bf16.msra.mxu0 %v953
      %975 = vmatpush.bf16.msra.mxu0 %v952
      %976 = vmatmul.bf16.gmra.mxu0 %v899
      %v977 = vpop.f32.mrf.mxu0
      %v978 = vadd.f32 0.0, %v977
      %v979 = vpop.f32.mrf.mxu0
      %v980 = vadd.f32 0.0, %v979
      %981 = vmatmul.bf16.gmra.mxu0 %v900
      %v982 = vpop.f32.mrf.mxu0
      %v983 = vadd.f32 0.0, %v982
      %v984 = vpop.f32.mrf.mxu0
      %v985 = vadd.f32 0.0, %v984
      %986 = vmatmul.bf16.gmra.mxu0 %v901
      %v987 = vpop.f32.mrf.mxu0
      %v988 = vadd.f32 0.0, %v987
      %v989 = vpop.f32.mrf.mxu0
      %v990 = vadd.f32 0.0, %v989
      %991 = vmatmul.bf16.gmra.mxu0 %v902
      %v992 = vpop.f32.mrf.mxu0
      %v993 = vadd.f32 0.0, %v992
      %v994 = vpop.f32.mrf.mxu0
      %v995 = vadd.f32 0.0, %v994
      %996 = vdwg.mxu0
      %v997 = vadd.f32 %v882, %v978
      %v998 = vadd.f32 %v883, %v980
      %v999 = vadd.f32 %v884, %v983
      %v1000 = vadd.f32 %v885, %v985
      %v1001 = vadd.f32 %v886, %v988
      %v1002 = vadd.f32 %v887, %v990
      %v1003 = vadd.f32 %v888, %v993
      %v1004 = vadd.f32 %v889, %v995
      %v1005 = vld [vmem:[%s890 + $0x1] sm:$0xff]
      %v1006 = vld [vmem:[%s890 + $0x11] sm:$0xff]
      %v1007 = vld [vmem:[%s890 + $0x21] sm:$0xff]
      %v1008 = vld [vmem:[%s890 + $0x31] sm:$0xff]
      %v1009 = vld [vmem:[%s890 + $0x41] sm:$0xff]
      %v1010 = vld [vmem:[%s890 + $0x51] sm:$0xff]
      %v1011 = vld [vmem:[%s890 + $0x61] sm:$0xff]
      %v1012 = vld [vmem:[%s890 + $0x71] sm:$0xff]
      %v1013 = vpack.c.bf16 %v1006, %v1005
      %v1014 = vpack.c.bf16 %v1008, %v1007
      %v1015 = vpack.c.bf16 %v1010, %v1009
      %v1016 = vpack.c.bf16 %v1012, %v1011
      %s1017 = scalar_lea.vmem %s210, 448
      %v1018 = vld [vmem:[%s1017] sm:$0xf]
      %v1019 = vld [vmem:[%s1017 + $0x4] sm:$0xf]
      %v1020 = vld [vmem:[%s1017 + $0x8] sm:$0xf]
      %v1021 = vld [vmem:[%s1017 + $0xc] sm:$0xf]
      %v1022 = vld [vmem:[%s1017 + $0x10] sm:$0xf]
      %v1023 = vld [vmem:[%s1017 + $0x14] sm:$0xf]
      %v1024 = vld [vmem:[%s1017 + $0x18] sm:$0xf]
      %v1025 = vld [vmem:[%s1017 + $0x1c] sm:$0xf]
      %v1026 = vld [vmem:[%s1017 + $0x20] sm:$0xf]
      %v1027 = vld [vmem:[%s1017 + $0x24] sm:$0xf]
      %v1028 = vld [vmem:[%s1017 + $0x28] sm:$0xf]
      %v1029 = vld [vmem:[%s1017 + $0x2c] sm:$0xf]
      %v1030 = vld [vmem:[%s1017 + $0x30] sm:$0xf]
      %v1031 = vld [vmem:[%s1017 + $0x34] sm:$0xf]
      %v1032 = vld [vmem:[%s1017 + $0x38] sm:$0xf]
      %v1033 = vld [vmem:[%s1017 + $0x3c] sm:$0xf]
      %v1050 = vunpack.c.l.b16 %v1018
      %v1051 = vunpack.c.l.b16 %v1019
      %v1052 = vunpack.c.l.b16 %v1020
      %v1053 = vunpack.c.l.b16 %v1021
      %v1054 = vunpack.c.l.b16 %v1022
      %v1055 = vunpack.c.l.b16 %v1023
      %v1056 = vunpack.c.l.b16 %v1024
      %v1057 = vunpack.c.l.b16 %v1025
      %v1058 = vunpack.c.l.b16 %v1026
      %v1059 = vunpack.c.l.b16 %v1027
      %v1060 = vunpack.c.l.b16 %v1028
      %v1061 = vunpack.c.l.b16 %v1029
      %v1062 = vunpack.c.l.b16 %v1030
      %v1063 = vunpack.c.l.b16 %v1031
      %v1064 = vunpack.c.l.b16 %v1032
      %v1065 = vunpack.c.l.b16 %v1033
      %v1066 = vpack.c.b16 %v1051, %v1050
      %v1067 = vpack.c.b16 %v1053, %v1052
      %v1068 = vpack.c.b16 %v1055, %v1054
      %v1069 = vpack.c.b16 %v1057, %v1056
      %v1070 = vpack.c.b16 %v1059, %v1058
      %v1071 = vpack.c.b16 %v1061, %v1060
      %v1072 = vpack.c.b16 %v1063, %v1062
      %v1073 = vpack.c.b16 %v1065, %v1064
      %1082 = vmatpush.bf16.msra.mxu0 %v1073
      %1083 = vmatpush.bf16.msra.mxu0 %v1072
      %1084 = vmatpush.bf16.msra.mxu0 %v1071
      %1085 = vmatpush.bf16.msra.mxu0 %v1070
      %1086 = vmatpush.bf16.msra.mxu0 %v1069
      %1087 = vmatpush.bf16.msra.mxu0 %v1068
      %1088 = vmatpush.bf16.msra.mxu0 %v1067
      %1089 = vmatpush.bf16.msra.mxu0 %v1066
      %1090 = vmatmul.bf16.gmra.mxu0 %v1013
      %v1091 = vpop.f32.mrf.mxu0
      %v1092 = vadd.f32 0.0, %v1091
      %v1093 = vpop.f32.mrf.mxu0
      %v1094 = vadd.f32 0.0, %v1093
      %1095 = vmatmul.bf16.gmra.mxu0 %v1014
      %v1096 = vpop.f32.mrf.mxu0
      %v1097 = vadd.f32 0.0, %v1096
      %v1098 = vpop.f32.mrf.mxu0
      %v1099 = vadd.f32 0.0, %v1098
      %1100 = vmatmul.bf16.gmra.mxu0 %v1015
      %v1101 = vpop.f32.mrf.mxu0
      %v1102 = vadd.f32 0.0, %v1101
      %v1103 = vpop.f32.mrf.mxu0
      %v1104 = vadd.f32 0.0, %v1103
      %1105 = vmatmul.bf16.gmra.mxu0 %v1016
      %v1106 = vpop.f32.mrf.mxu0
      %v1107 = vadd.f32 0.0, %v1106
      %v1108 = vpop.f32.mrf.mxu0
      %v1109 = vadd.f32 0.0, %v1108
      %1110 = vdwg.mxu0
      %v1111 = vadd.f32 %v997, %v1092
      %v1112 = vadd.f32 %v998, %v1094
      %v1113 = vadd.f32 %v999, %v1097
      %v1114 = vadd.f32 %v1000, %v1099
      %v1115 = vadd.f32 %v1001, %v1102
      %v1116 = vadd.f32 %v1002, %v1104
      %v1117 = vadd.f32 %v1003, %v1107
      %v1118 = vadd.f32 %v1004, %v1109
      %v1119 = vld [vmem:[%s890 + $0x2] sm:$0xff]
      %v1120 = vld [vmem:[%s890 + $0x12] sm:$0xff]
      %v1121 = vld [vmem:[%s890 + $0x22] sm:$0xff]
      %v1122 = vld [vmem:[%s890 + $0x32] sm:$0xff]
      %v1123 = vld [vmem:[%s890 + $0x42] sm:$0xff]
      %v1124 = vld [vmem:[%s890 + $0x52] sm:$0xff]
      %v1125 = vld [vmem:[%s890 + $0x62] sm:$0xff]
      %v1126 = vld [vmem:[%s890 + $0x72] sm:$0xff]
      %v1127 = vpack.c.bf16 %v1120, %v1119
      %v1128 = vpack.c.bf16 %v1122, %v1121
      %v1129 = vpack.c.bf16 %v1124, %v1123
      %v1130 = vpack.c.bf16 %v1126, %v1125
      %s1131 = scalar_lea.vmem %s210, 512
      %v1132 = vld [vmem:[%s1131] sm:$0xf]
      %v1133 = vld [vmem:[%s1131 + $0x4] sm:$0xf]
      %v1134 = vld [vmem:[%s1131 + $0x8] sm:$0xf]
      %v1135 = vld [vmem:[%s1131 + $0xc] sm:$0xf]
      %v1136 = vld [vmem:[%s1131 + $0x10] sm:$0xf]
      %v1137 = vld [vmem:[%s1131 + $0x14] sm:$0xf]
      %v1138 = vld [vmem:[%s1131 + $0x18] sm:$0xf]
      %v1139 = vld [vmem:[%s1131 + $0x1c] sm:$0xf]
      %v1140 = vld [vmem:[%s1131 + $0x20] sm:$0xf]
      %v1141 = vld [vmem:[%s1131 + $0x24] sm:$0xf]
      %v1142 = vld [vmem:[%s1131 + $0x28] sm:$0xf]
      %v1143 = vld [vmem:[%s1131 + $0x2c] sm:$0xf]
      %v1144 = vld [vmem:[%s1131 + $0x30] sm:$0xf]
      %v1145 = vld [vmem:[%s1131 + $0x34] sm:$0xf]
      %v1146 = vld [vmem:[%s1131 + $0x38] sm:$0xf]
      %v1147 = vld [vmem:[%s1131 + $0x3c] sm:$0xf]
      %v1164 = vunpack.c.l.b16 %v1132
      %v1165 = vunpack.c.l.b16 %v1133
      %v1166 = vunpack.c.l.b16 %v1134
      %v1167 = vunpack.c.l.b16 %v1135
      %v1168 = vunpack.c.l.b16 %v1136
      %v1169 = vunpack.c.l.b16 %v1137
      %v1170 = vunpack.c.l.b16 %v1138
      %v1171 = vunpack.c.l.b16 %v1139
      %v1172 = vunpack.c.l.b16 %v1140
      %v1173 = vunpack.c.l.b16 %v1141
      %v1174 = vunpack.c.l.b16 %v1142
      %v1175 = vunpack.c.l.b16 %v1143
      %v1176 = vunpack.c.l.b16 %v1144
      %v1177 = vunpack.c.l.b16 %v1145
      %v1178 = vunpack.c.l.b16 %v1146
      %v1179 = vunpack.c.l.b16 %v1147
      %v1180 = vpack.c.b16 %v1165, %v1164
      %v1181 = vpack.c.b16 %v1167, %v1166
      %v1182 = vpack.c.b16 %v1169, %v1168
      %v1183 = vpack.c.b16 %v1171, %v1170
      %v1184 = vpack.c.b16 %v1173, %v1172
      %v1185 = vpack.c.b16 %v1175, %v1174
      %v1186 = vpack.c.b16 %v1177, %v1176
      %v1187 = vpack.c.b16 %v1179, %v1178
      %1196 = vmatpush.bf16.msra.mxu0 %v1187
      %1197 = vmatpush.bf16.msra.mxu0 %v1186
      %1198 = vmatpush.bf16.msra.mxu0 %v1185
      %1199 = vmatpush.bf16.msra.mxu0 %v1184
      %1200 = vmatpush.bf16.msra.mxu0 %v1183
      %1201 = vmatpush.bf16.msra.mxu0 %v1182
      %1202 = vmatpush.bf16.msra.mxu0 %v1181
      %1203 = vmatpush.bf16.msra.mxu0 %v1180
      %1204 = vmatmul.bf16.gmra.mxu0 %v1127
      %v1205 = vpop.f32.mrf.mxu0
      %v1206 = vadd.f32 0.0, %v1205
      %v1207 = vpop.f32.mrf.mxu0
      %v1208 = vadd.f32 0.0, %v1207
      %1209 = vmatmul.bf16.gmra.mxu0 %v1128
      %v1210 = vpop.f32.mrf.mxu0
      %v1211 = vadd.f32 0.0, %v1210
      %v1212 = vpop.f32.mrf.mxu0
      %v1213 = vadd.f32 0.0, %v1212
      %1214 = vmatmul.bf16.gmra.mxu0 %v1129
      %v1215 = vpop.f32.mrf.mxu0
      %v1216 = vadd.f32 0.0, %v1215
      %v1217 = vpop.f32.mrf.mxu0
      %v1218 = vadd.f32 0.0, %v1217
      %1219 = vmatmul.bf16.gmra.mxu0 %v1130
      %v1220 = vpop.f32.mrf.mxu0
      %v1221 = vadd.f32 0.0, %v1220
      %v1222 = vpop.f32.mrf.mxu0
      %v1223 = vadd.f32 0.0, %v1222
      %1224 = vdwg.mxu0
      %v1225 = vadd.f32 %v1111, %v1206
      %v1226 = vadd.f32 %v1112, %v1208
      %v1227 = vadd.f32 %v1113, %v1211
      %v1228 = vadd.f32 %v1114, %v1213
      %v1229 = vadd.f32 %v1115, %v1216
      %v1230 = vadd.f32 %v1116, %v1218
      %v1231 = vadd.f32 %v1117, %v1221
      %v1232 = vadd.f32 %v1118, %v1223
      %v1233 = vld [vmem:[%s213] sm:$0x1]
      %v1235 = vperm.slane %v1233, 0
      %v1237 = vadd.f32 %v1225, %v1235
      %v1238 = vadd.f32 %v1226, %v1235
      %v1239 = vadd.f32 %v1227, %v1235
      %v1240 = vadd.f32 %v1228, %v1235
      %v1241 = vadd.f32 %v1229, %v1235
      %v1242 = vadd.f32 %v1230, %v1235
      %v1243 = vadd.f32 %v1231, %v1235
      %v1244 = vadd.f32 %v1232, %v1235
      %v1245 = vadd.f32 %v1237, %v1238
      %v1246 = vadd.f32 %v1245, %v1239
      %v1247 = vadd.f32 %v1246, %v1240
      %v1248 = vadd.f32 %v1247, %v1241
      %v1249 = vadd.f32 %v1248, %v1242
      %v1250 = vadd.f32 %v1249, %v1243
      %v1251 = vadd.f32 %v1250, %v1244
      %v1252 = vrot.slane %v1251, 4
      %v1253 = vadd.f32 %v1251, %v1252
      %v1254 = vrot.slane %v1253, 2
      %v1255 = vadd.f32 %v1253, %v1254
      %v1256 = vrot.slane %v1255, 1
      %v1257 = vadd.f32 %v1255, %v1256
      %v1258 = vadd.f32 %v1257, 0.0
      %v1259 = vmul.f32 %v1237, %v1237
      %v1260 = vmul.f32 %v1238, %v1238
      %v1261 = vmul.f32 %v1239, %v1239
      %v1262 = vmul.f32 %v1240, %v1240
      %v1263 = vmul.f32 %v1241, %v1241
      %v1264 = vmul.f32 %v1242, %v1242
      %v1265 = vmul.f32 %v1243, %v1243
      %v1266 = vmul.f32 %v1244, %v1244
      %v1267 = vadd.f32 %v1259, %v1260
      %v1268 = vadd.f32 %v1267, %v1261
      %v1269 = vadd.f32 %v1268, %v1262
      %v1270 = vadd.f32 %v1269, %v1263
      %v1271 = vadd.f32 %v1270, %v1264
      %v1272 = vadd.f32 %v1271, %v1265
      %v1273 = vadd.f32 %v1272, %v1266
      %v1274 = vrot.slane %v1273, 4
      %v1275 = vadd.f32 %v1273, %v1274
      %v1276 = vrot.slane %v1275, 2
      %v1277 = vadd.f32 %v1275, %v1276
      %v1278 = vrot.slane %v1277, 1
      %v1279 = vadd.f32 %v1277, %v1278
      %v1280 = vadd.f32 %v1279, 0.0
      %1281 = vst [vmem:[%s221] sm:$0xff] %v1237
      %1282 = vst [vmem:[%s221 + $0x8] sm:$0xff] %v1238
      %1283 = vst [vmem:[%s221 + $0x10] sm:$0xff] %v1239
      %1284 = vst [vmem:[%s221 + $0x18] sm:$0xff] %v1240
      %1285 = vst [vmem:[%s221 + $0x20] sm:$0xff] %v1241
      %1286 = vst [vmem:[%s221 + $0x28] sm:$0xff] %v1242
      %1287 = vst [vmem:[%s221 + $0x30] sm:$0xff] %v1243
      %1288 = vst [vmem:[%s221 + $0x38] sm:$0xff] %v1244
      %v1289 = vmul.f32 %v1258, 0.015625
      %v1290 = vmul.f32 %v1280, 0.015625
      %v1291 = vmul.f32 %v1289, %v1289
      %v1292 = vsub.f32 %v1290, %v1291
      %v1293 = vmax.f32 %v1292, 0.0
      %v1294 = vadd.f32 %v1293, 1e-05
      %v1295 = vrsqrt.pop %v1294
      %v1296 = vmul.f32 %v1295, %v1294
      %v1297 = vmul.f32 %v1296, %v1295
      %v1298 = vmul.f32 0.5, %v1297
      %v1299 = vsub.f32 1.5, %v1298
      %v1300 = vmul.f32 %v1295, %v1299
      %vm1301 = vweird.f32 %v1294
      %vm1302 = vweird.f32 %v1295
      %vm1303 = vmor %vm1301, %vm1302
      %v1304 = vsel %vm1303, %v1295, %v1300
      %v1305 = vld [vmem:[%s221] sm:$0xff]
      %v1306 = vld [vmem:[%s221 + $0x8] sm:$0xff]
      %v1307 = vld [vmem:[%s221 + $0x10] sm:$0xff]
      %v1308 = vld [vmem:[%s221 + $0x18] sm:$0xff]
      %v1309 = vld [vmem:[%s221 + $0x20] sm:$0xff]
      %v1310 = vld [vmem:[%s221 + $0x28] sm:$0xff]
      %v1311 = vld [vmem:[%s221 + $0x30] sm:$0xff]
      %v1312 = vld [vmem:[%s221 + $0x38] sm:$0xff]
      %v1313 = vsub.f32 %v1305, %v1289
      %v1314 = vsub.f32 %v1306, %v1289
      %v1315 = vsub.f32 %v1307, %v1289
      %v1316 = vsub.f32 %v1308, %v1289
      %v1317 = vsub.f32 %v1309, %v1289
      %v1318 = vsub.f32 %v1310, %v1289
      %v1319 = vsub.f32 %v1311, %v1289
      %v1320 = vsub.f32 %v1312, %v1289
      %v1321 = vmul.f32 %v1313, %v1304
      %v1322 = vmul.f32 %v1314, %v1304
      %v1323 = vmul.f32 %v1315, %v1304
      %v1324 = vmul.f32 %v1316, %v1304
      %v1325 = vmul.f32 %v1317, %v1304
      %v1326 = vmul.f32 %v1318, %v1304
      %v1327 = vmul.f32 %v1319, %v1304
      %v1328 = vmul.f32 %v1320, %v1304
      %vm1329 = vcmp.ge.f32.partialorder %v1321, 0.0
      %vm1330 = vcmp.ge.f32.partialorder %v1322, 0.0
      %vm1331 = vcmp.ge.f32.partialorder %v1323, 0.0
      %vm1332 = vcmp.ge.f32.partialorder %v1324, 0.0
      %vm1333 = vcmp.ge.f32.partialorder %v1325, 0.0
      %vm1334 = vcmp.ge.f32.partialorder %v1326, 0.0
      %vm1335 = vcmp.ge.f32.partialorder %v1327, 0.0
      %vm1336 = vcmp.ge.f32.partialorder %v1328, 0.0
      %v1337 = vmul.f32 %v1321, 0.2
      %v1338 = vmul.f32 %v1322, 0.2
      %v1339 = vmul.f32 %v1323, 0.2
      %v1340 = vmul.f32 %v1324, 0.2
      %v1341 = vmul.f32 %v1325, 0.2
      %v1342 = vmul.f32 %v1326, 0.2
      %v1343 = vmul.f32 %v1327, 0.2
      %v1344 = vmul.f32 %v1328, 0.2
      %v1345 = vsel %vm1329, %v1321, %v1337
      %v1346 = vsel %vm1330, %v1322, %v1338
      %v1347 = vsel %vm1331, %v1323, %v1339
      %v1348 = vsel %vm1332, %v1324, %v1340
      %v1349 = vsel %vm1333, %v1325, %v1341
      %v1350 = vsel %vm1334, %v1326, %v1342
      %v1351 = vsel %vm1335, %v1327, %v1343
      %v1352 = vsel %vm1336, %v1328, %v1344
      %1353 = vst [vmem:[%s221] sm:$0xff] %v1345
      %1354 = vst [vmem:[%s221 + $0x8] sm:$0xff] %v1346
      %1355 = vst [vmem:[%s221 + $0x10] sm:$0xff] %v1347
      %1356 = vst [vmem:[%s221 + $0x18] sm:$0xff] %v1348
      %1357 = vst [vmem:[%s221 + $0x20] sm:$0xff] %v1349
      %1358 = vst [vmem:[%s221 + $0x28] sm:$0xff] %v1350
      %1359 = vst [vmem:[%s221 + $0x30] sm:$0xff] %v1351
      %1360 = vst [vmem:[%s221 + $0x38] sm:$0xff] %v1352
      %p1361 = scmp.lt.s32.totalorder %s18, 1
      %s1362 = scalar_select %p1361, %s18, 1
      %p1363 = scmp.lt.s32.totalorder %s19, 0
      %s1364 = scalar_select %p1363, %s19, 0
      %s1365 = smul.addr %s1362, 8
      %s1366 = sadd.s32 %s1364, %s1365
      %s1367 = smul.addr %s1366, 8
      %s1368 = scalar_lea.vmem %s3, %s1367
      // Predicated region
      $region33: #{unet_down_forward.3} parent=31 // pred_check
        %p1369 = pneg %p124
      $region34: #{unet_down_forward.3} parent=31 // pred_check_branch
        %1371 = sbr.rel (%p1369) target = $region36
      $region35: #{unet_down_forward.3} parent=31 // pred_region
        _
      $region36: #{unet_down_forward.3} parent=31 // pred_fallthru
        _
    $region32: #{unet_down_forward.3} parent=5 // pred_fallthru
      _
    %p1372 = scmp.le.s32.totalorder 2, %s9
    // Predicated region
    $region37: #{unet_down_forward.3} parent=5 // pred_check
      %p1373 = pneg %p1372
    $region38: #{unet_down_forward.3} parent=5 // pred_check_branch
      %1375 = sbr.rel (%p1373) target = $region40
    $region39: #{unet_down_forward.3} parent=5 // pred_region
      %s1376 = ssub.s32 %s9, 2
      // Predicated region
      $region41: #{unet_down_forward.3} parent=39 // pred_check
        %p1377 = pneg %p130
      $region42: #{unet_down_forward.3} parent=39 // pred_check_branch
        %1379 = sbr.rel (%p1377) target = $region44
      $region43: #{unet_down_forward.3} parent=39 // pred_region
        %p1380 = scmp.lt.s32.totalorder %s20, 1
        %s1381 = scalar_select %p1380, %s20, 1
        %p1382 = scmp.lt.s32.totalorder %s21, 0
        %s1383 = scalar_select %p1382, %s21, 0
        %s1384 = smul.addr %s1381, 8
        %s1385 = sadd.s32 %s1383, %s1384
        %s1386 = smul.addr %s1385, 8
        %s1387 = scalar_lea.vmem %s3, %s1386
      $region44: #{unet_down_forward.3} parent=39 // pred_fallthru
        _
    $region40: #{unet_down_forward.3} parent=5 // pred_fallthru
      _
  $region6: #{unet_down_forward.3} parent=0 // loop_footer
    %s13 = sadd.s32 1, %s9
  $region7: #{unet_down_forward.3} parent=0 // loop_footer_branch
    %8 = sbr.rel target = $region3
  $region8: #{unet_down_forward.3} parent=0 // loop_exit
    _

</llo_original>
